<compile_context>
chip_gen: v7x
topology: tpu7x:2x2x1
jax: 0.10.0
libtpu: 0.0.40
codegen_flags: <defaults>
</compile_context>

<pallas_src>
import numpy as np
import jax
import jax.numpy as jnp
from jax import lax
from jax.experimental import pallas as pl
from jax.experimental.pallas import tpu as pltpu

_BN_EPS = 1e-5
BRANCHES = 3            # offset, size, keypoint
_KEYPOINT_BRANCH = 2    # sigmoid applied on this branch only


# --------------------------------- kernel ------------------------------------

def _make_head_kernel(M, tap_offsets):
    """Build the fused Head kernel for a flattened pixel count M (= N*H*W)."""

    def _bn(y, gamma, beta):
        # Training-mode BatchNorm over the lane (pixel) axis, two-pass variance,
        # folded to a single FMA.  y: [C, M] f32; gamma/beta: [C, 1] f32.
        mean = jnp.mean(y, axis=-1, keepdims=True)
        diff = y - mean
        var = jnp.mean(diff * diff, axis=-1, keepdims=True)
        scale = gamma * lax.rsqrt(var + _BN_EPS)
        return y * scale + (beta - mean * scale)

    def _dw3x3(x_f32, mask_ref, w_ref):
        # Depthwise 3x3 conv (stride 1, pad 1) as a 9-tap weighted sum on the
        # VPU.  Taps are built in-kernel: pltpu.roll along the flattened pixel
        # axis + boundary mask.  x_f32: [C, M]; mask_ref: [9, 1, M];
        # w_ref: [9, C, 1] (tap-major -> no per-tap weight slicing/broadcast).
        acc = None
        for t, d in enumerate(tap_offsets):
            if d == 0:                       # center tap: no shift, mask == 1
                term = x_f32 * w_ref[t]
            else:
                tap = pltpu.roll(x_f32, (-d) % M, axis=1)
                term = (tap * mask_ref[t]) * w_ref[t]
            acc = term if acc is None else acc + term
        return acc

    def _pw(x_f32, w_ref):
        # 1x1 conv on the MXU: block-diagonal [C_out_total, C_in_total] @ [C_in_total, M].
        return jnp.dot(w_ref[...], x_f32.astype(jnp.bfloat16),
                       preferred_element_type=jnp.float32)

    def kernel(x_ref, mask_ref,
               dw1w_ref, dw1g_ref, dw1b_ref, pw1w_ref, pw1g_ref, pw1b_ref,
               dw2w_ref, dw2g_ref, dw2b_ref, pw2w_ref, pw2g_ref, pw2b_ref,
               outw_ref, outb_ref, sig_ref, o_ref):
        # stage 1: dw3x3 Conv+BN -> pw1x1 Conv+BN -> ReLU     (all 3 branches folded)
        x = x_ref[...].astype(jnp.float32)                              # [3*Cin, M]
        h1 = _bn(_dw3x3(x, mask_ref, dw1w_ref), dw1g_ref[...], dw1b_ref[...])
        a1 = jnp.maximum(_bn(_pw(h1, pw1w_ref), pw1g_ref[...], pw1b_ref[...]), 0.0)
        # re-quantize to bf16 (conv-operand precision policy, same rounding
        # point as the previous two-launch version's HBM bf16 cast)
        a1 = a1.astype(jnp.bfloat16).astype(jnp.float32)                # [3*Cout, M]

        # stage 2: dw3x3 Conv+BN -> pw1x1 Conv+BN -> ReLU -> 1x1 out conv (+bias)
        h2 = _bn(_dw3x3(a1, mask_ref, dw2w_ref), dw2g_ref[...], dw2b_ref[...])
        a2 = jnp.maximum(_bn(_pw(h2, pw2w_ref), pw2g_ref[...], pw2b_ref[...]), 0.0)
        z = _pw(a2, outw_ref) + outb_ref[...]                           # [3*n_out, M]

        # keypoint rows get sigmoid; single select, single store.
        sig = 1.0 / (1.0 + jnp.exp(-z))
        o_ref[...] = jnp.where(sig_ref[...] > 0.5, sig, z)

    return kernel


# ------------------------------ host-side glue --------------------------------

def _block_diag(w):
    """[B, O, I] -> [B*O, B*I] block-diagonal (per-branch pointwise weights)."""
    B, O, I = w.shape
    eye = jnp.eye(B, dtype=w.dtype)
    return (eye[:, None, :, None] * w[:, :, None, :]).reshape(B * O, B * I)


def _dw_taps_layout(w):
    """[B, C, 3, 3] -> [9, B*C, 1]: tap-major, branch/channel folded to sublanes."""
    B, C = w.shape[:2]
    return w.reshape(B, C, 9).transpose(2, 0, 1).reshape(9, B * C, 1)


def _bq(a):
    """bf16-quantize, keep f32 container (bf16 conv-operand policy; exact upcast)."""
    return a.astype(jnp.bfloat16).astype(jnp.float32)


@jax.jit
def head_forward(x, params):
    """x: [N, Cin, H, W] f32.  Returns (x_offset, x_size, x_keypoint) in NCHW."""
    N, Cin, H, W = x.shape
    M = N * H * W
    Cout = params["pw1_w"].shape[1]
    n_out = params["out_w"].shape[1]     # 2 for all three branches (num_class=2)

    # ---- static (shape-only) constants: tap offsets, boundary masks, sigmoid rows
    tap_offsets = [dh * W + dw for dh in (-1, 0, 1) for dw in (-1, 0, 1)]
    mm = np.arange(M)
    hh = (mm % (H * W)) // W
    ww = mm % W
    masks = np.stack(
        [((hh + dh >= 0) & (hh + dh < H) & (ww + dw >= 0) & (ww + dw < W))
         for dh in (-1, 0, 1) for dw in (-1, 0, 1)]
    ).astype(np.float32)[:, None, :]                                    # [9, 1, M]
    sig_rows = np.zeros((BRANCHES * n_out, 1), np.float32)
    sig_rows[_KEYPOINT_BRANCH * n_out:(_KEYPOINT_BRANCH + 1) * n_out] = 1.0

    # ---- kernel-layout parameters (branch axis folded into sublanes) ----
    x_cm = x.transpose(1, 0, 2, 3).reshape(Cin, M)
    x3 = jnp.tile(x_cm, (BRANCHES, 1)).astype(jnp.bfloat16)             # [3*Cin, M]
    dw1_w = _bq(_dw_taps_layout(params["dw1_w"]))                       # [9, 3*Cin, 1]
    dw2_w = _bq(_dw_taps_layout(params["dw2_w"]))                       # [9, 3*Cout, 1]
    pw1_w = _block_diag(params["pw1_w"]).astype(jnp.bfloat16)           # [3*Cout, 3*Cin]
    pw2_w = _block_diag(params["pw2_w"]).astype(jnp.bfloat16)           # [3*Cout, 3*Cout]
    out_w = _block_diag(params["out_w"]).astype(jnp.bfloat16)           # [3*n_out, 3*Cout]
    out_b = params["out_b"].reshape(-1, 1).astype(jnp.float32)          # [3*n_out, 1]
    col = lambda p: params[p].reshape(-1, 1).astype(jnp.float32)        # BN affine cols

    # Single launch, single grid step; every operand is a whole-array VMEM block
    # (total working set << 1 MiB at these shapes).
    out = pl.pallas_call(
        _make_head_kernel(M, tap_offsets),
        out_shape=jax.ShapeDtypeStruct((BRANCHES * n_out, M), jnp.float32),
    )(x3, jnp.asarray(masks),
      dw1_w, col("dw1_g"), col("dw1_b"), pw1_w, col("pw1_g"), col("pw1_b"),
      dw2_w, col("dw2_g"), col("dw2_b"), pw2_w, col("pw2_g"), col("pw2_b"),
      out_w, out_b, jnp.asarray(sig_rows))

    # [3*n_out, M] channel-major -> three NCHW outputs (tiny permute).
    outs = out.reshape(BRANCHES, n_out, N, H, W).transpose(0, 2, 1, 3, 4)
    return outs[0], outs[1], outs[2]


# ------------------------------- references -----------------------------------

def _head_reference(x, p, *, mixed_precision):
    """Pure-JAX (lax.conv based) reference, NCHW.  mixed_precision=True mirrors
    the kernel's bf16-operand / f32-accumulate policy; False = pure-f32 module
    semantics."""
    op_dtype = jnp.bfloat16 if mixed_precision else jnp.float32
    cast = lambda a: a.astype(op_dtype)
    Cin = x.shape[1]

    def conv(h, w, *, padding=0, groups=1):
        return lax.conv_general_dilated(
            cast(h), cast(w), window_strides=(1, 1),
            padding=[(padding, padding), (padding, padding)],
            feature_group_count=groups,
            dimension_numbers=("NCHW", "OIHW", "NCHW"),
            preferred_element_type=jnp.float32)

    def bn(y, gamma, beta):
        mean = y.mean(axis=(0, 2, 3), keepdims=True)
        var = jnp.square(y - mean).mean(axis=(0, 2, 3), keepdims=True)
        scale = gamma.reshape(1, -1, 1, 1) * lax.rsqrt(var + _BN_EPS)
        return y * scale + (beta.reshape(1, -1, 1, 1) - mean * scale)

    outs = []
    for b in range(BRANCHES):
        h = bn(conv(x, p["dw1_w"][b][:, None], padding=1, groups=Cin),
               p["dw1_g"][b], p["dw1_b"][b])
        h = jax.nn.relu(bn(conv(h, p["pw1_w"][b][..., None, None]),
                           p["pw1_g"][b], p["pw1_b"][b]))
        Cout = h.shape[1]
        h = bn(conv(h, p["dw2_w"][b][:, None], padding=1, groups=Cout),
               p["dw2_g"][b], p["dw2_b"][b])
        h = jax.nn.relu(bn(conv(h, p["pw2_w"][b][..., None, None]),
                           p["pw2_g"][b], p["pw2_b"][b]))
        z = conv(h, p["out_w"][b][..., None, None]) \
            + p["out_b"][b].reshape(1, -1, 1, 1)
        outs.append(jax.nn.sigmoid(z) if b == _KEYPOINT_BRANCH else z)
    return tuple(outs)


# ----------------------------------- main --------------------------------------

if __name__ == "__main__":
    # Head(in_channels=4, out_channels=8, num_class=2); x: [2, 4, 16, 16].
    N, Cin, H, W = 2, 4, 16, 16
    Cout, n_out = 8, 2

    key = jax.random.PRNGKey(0)
    ks = iter(jax.random.split(key, 20))

    def normal(shape, scale):
        return scale * jax.random.normal(next(ks), shape, dtype=jnp.float32)

    def bn_gamma(shape):
        return 1.0 + 0.2 * jax.random.normal(next(ks), shape, dtype=jnp.float32)

    x = normal((N, Cin, H, W), 1.0)
    params = dict(
        dw1_w=normal((BRANCHES, Cin, 3, 3), 0.3),
        dw1_g=bn_gamma((BRANCHES, Cin)), dw1_b=normal((BRANCHES, Cin), 0.1),
        pw1_w=normal((BRANCHES, Cout, Cin), 0.5),
        pw1_g=bn_gamma((BRANCHES, Cout)), pw1_b=normal((BRANCHES, Cout), 0.1),
        dw2_w=normal((BRANCHES, Cout, 3, 3), 0.3),
        dw2_g=bn_gamma((BRANCHES, Cout)), dw2_b=normal((BRANCHES, Cout), 0.1),
        pw2_w=normal((BRANCHES, Cout, Cout), 0.35),
        pw2_g=bn_gamma((BRANCHES, Cout)), pw2_b=normal((BRANCHES, Cout), 0.1),
        out_w=normal((BRANCHES, n_out, Cout), 0.3),
        out_b=normal((BRANCHES, n_out), 0.1),
    )

    outs = jax.block_until_ready(head_forward(x, params))

    refs_mp = _head_reference(x, params, mixed_precision=True)    # precision-matched
    refs_f32 = _head_reference(x, params, mixed_precision=False)  # pure-f32 semantics

    for name, got, r_mp, r_f32 in zip(("offset", "size", "keypoint"),
                                      outs, refs_mp, refs_f32):
        assert got.shape == r_f32.shape == (N, n_out, H, W), (name, got.shape)
        # Tight check vs the bf16-operand / f32-accumulate reference (same
        # rounding points as the kernel path).
        assert jnp.allclose(got, r_mp, atol=3e-2, rtol=3e-2), name
        # Coarse sanity bound vs full-f32 module semantics (bounds the bf16
        # quantization introduced on purpose for the MXU/VPU operands).
        assert jnp.allclose(got, r_f32, atol=1.5e-1, rtol=1e-1), name

    print("KERNEL_OK")
</pallas_src>

<mosaic_0001>
module attributes {stable_mosaic.version = 11 : i64} {
  func.func @kernel(%arg0: memref<12x512xbf16, #tpu.memory_space<vmem>>, %arg1: memref<9x1x512xf32, #tpu.memory_space<vmem>>, %arg2: memref<9x12x1xf32, #tpu.memory_space<vmem>>, %arg3: memref<12x1xf32, #tpu.memory_space<vmem>>, %arg4: memref<12x1xf32, #tpu.memory_space<vmem>>, %arg5: memref<24x12xbf16, #tpu.memory_space<vmem>>, %arg6: memref<24x1xf32, #tpu.memory_space<vmem>>, %arg7: memref<24x1xf32, #tpu.memory_space<vmem>>, %arg8: memref<9x24x1xf32, #tpu.memory_space<vmem>>, %arg9: memref<24x1xf32, #tpu.memory_space<vmem>>, %arg10: memref<24x1xf32, #tpu.memory_space<vmem>>, %arg11: memref<24x24xbf16, #tpu.memory_space<vmem>>, %arg12: memref<24x1xf32, #tpu.memory_space<vmem>>, %arg13: memref<24x1xf32, #tpu.memory_space<vmem>>, %arg14: memref<6x24xbf16, #tpu.memory_space<vmem>>, %arg15: memref<6x1xf32, #tpu.memory_space<vmem>>, %arg16: memref<6x1xf32, #tpu.memory_space<vmem>>, %arg17: memref<6x512xf32, #tpu.memory_space<vmem>>) attributes {dimension_semantics = [], scalar_prefetch = 0 : i64, scratch_operands = 0 : i64, tpu.core_type = #tpu.core_type<tc>} {
    %c0 = arith.constant 0 : index
    %c0_0 = arith.constant 0 : index
    %0 = vector.load %arg0[%c0, %c0_0] : memref<12x512xbf16, #tpu.memory_space<vmem>>, vector<12x512xbf16>
    %1 = arith.extf %0 : vector<12x512xbf16> to vector<12x512xf32>
    %c17_i32 = arith.constant 17 : i32
    %2 = tpu.dynamic_rotate %1 by %c17_i32 dim 1 : vector<12x512xf32>, i32 -> vector<12x512xf32>
    %c0_1 = arith.constant 0 : index
    %c0_2 = arith.constant 0 : index
    %c0_3 = arith.constant 0 : index
    %3 = vector.load %arg1[%c0_1, %c0_2, %c0_3] : memref<9x1x512xf32, #tpu.memory_space<vmem>>, vector<1x1x512xf32>
    %4 = vector.shape_cast %3 : vector<1x1x512xf32> to vector<1x512xf32>
    %5 = vector.broadcast %4 : vector<1x512xf32> to vector<12x512xf32>
    %6 = arith.mulf %2, %5 : vector<12x512xf32>
    %c0_4 = arith.constant 0 : index
    %c0_5 = arith.constant 0 : index
    %c0_6 = arith.constant 0 : index
    %7 = vector.load %arg2[%c0_4, %c0_5, %c0_6] : memref<9x12x1xf32, #tpu.memory_space<vmem>>, vector<1x12x1xf32>
    %8 = vector.shape_cast %7 : vector<1x12x1xf32> to vector<12x1xf32>
    %9 = vector.broadcast %8 : vector<12x1xf32> to vector<12x512xf32>
    %10 = arith.mulf %6, %9 : vector<12x512xf32>
    %c16_i32 = arith.constant 16 : i32
    %11 = tpu.dynamic_rotate %1 by %c16_i32 dim 1 : vector<12x512xf32>, i32 -> vector<12x512xf32>
    %c1 = arith.constant 1 : index
    %c0_7 = arith.constant 0 : index
    %c0_8 = arith.constant 0 : index
    %12 = vector.load %arg1[%c1, %c0_7, %c0_8] : memref<9x1x512xf32, #tpu.memory_space<vmem>>, vector<1x1x512xf32>
    %13 = vector.shape_cast %12 : vector<1x1x512xf32> to vector<1x512xf32>
    %14 = vector.broadcast %13 : vector<1x512xf32> to vector<12x512xf32>
    %15 = arith.mulf %11, %14 : vector<12x512xf32>
    %c1_9 = arith.constant 1 : index
    %c0_10 = arith.constant 0 : index
    %c0_11 = arith.constant 0 : index
    %16 = vector.load %arg2[%c1_9, %c0_10, %c0_11] : memref<9x12x1xf32, #tpu.memory_space<vmem>>, vector<1x12x1xf32>
    %17 = vector.shape_cast %16 : vector<1x12x1xf32> to vector<12x1xf32>
    %18 = vector.broadcast %17 : vector<12x1xf32> to vector<12x512xf32>
    %19 = arith.mulf %15, %18 : vector<12x512xf32>
    %20 = arith.addf %10, %19 : vector<12x512xf32>
    %c15_i32 = arith.constant 15 : i32
    %21 = tpu.dynamic_rotate %1 by %c15_i32 dim 1 : vector<12x512xf32>, i32 -> vector<12x512xf32>
    %c2 = arith.constant 2 : index
    %c0_12 = arith.constant 0 : index
    %c0_13 = arith.constant 0 : index
    %22 = vector.load %arg1[%c2, %c0_12, %c0_13] : memref<9x1x512xf32, #tpu.memory_space<vmem>>, vector<1x1x512xf32>
    %23 = vector.shape_cast %22 : vector<1x1x512xf32> to vector<1x512xf32>
    %24 = vector.broadcast %23 : vector<1x512xf32> to vector<12x512xf32>
    %25 = arith.mulf %21, %24 : vector<12x512xf32>
    %c2_14 = arith.constant 2 : index
    %c0_15 = arith.constant 0 : index
    %c0_16 = arith.constant 0 : index
    %26 = vector.load %arg2[%c2_14, %c0_15, %c0_16] : memref<9x12x1xf32, #tpu.memory_space<vmem>>, vector<1x12x1xf32>
    %27 = vector.shape_cast %26 : vector<1x12x1xf32> to vector<12x1xf32>
    %28 = vector.broadcast %27 : vector<12x1xf32> to vector<12x512xf32>
    %29 = arith.mulf %25, %28 : vector<12x512xf32>
    %30 = arith.addf %20, %29 : vector<12x512xf32>
    %c1_i32 = arith.constant 1 : i32
    %31 = tpu.dynamic_rotate %1 by %c1_i32 dim 1 : vector<12x512xf32>, i32 -> vector<12x512xf32>
    %c3 = arith.constant 3 : index
    %c0_17 = arith.constant 0 : index
    %c0_18 = arith.constant 0 : index
    %32 = vector.load %arg1[%c3, %c0_17, %c0_18] : memref<9x1x512xf32, #tpu.memory_space<vmem>>, vector<1x1x512xf32>
    %33 = vector.shape_cast %32 : vector<1x1x512xf32> to vector<1x512xf32>
    %34 = vector.broadcast %33 : vector<1x512xf32> to vector<12x512xf32>
    %35 = arith.mulf %31, %34 : vector<12x512xf32>
    %c3_19 = arith.constant 3 : index
    %c0_20 = arith.constant 0 : index
    %c0_21 = arith.constant 0 : index
    %36 = vector.load %arg2[%c3_19, %c0_20, %c0_21] : memref<9x12x1xf32, #tpu.memory_space<vmem>>, vector<1x12x1xf32>
    %37 = vector.shape_cast %36 : vector<1x12x1xf32> to vector<12x1xf32>
    %38 = vector.broadcast %37 : vector<12x1xf32> to vector<12x512xf32>
    %39 = arith.mulf %35, %38 : vector<12x512xf32>
    %40 = arith.addf %30, %39 : vector<12x512xf32>
    %c4 = arith.constant 4 : index
    %c0_22 = arith.constant 0 : index
    %c0_23 = arith.constant 0 : index
    %41 = vector.load %arg2[%c4, %c0_22, %c0_23] : memref<9x12x1xf32, #tpu.memory_space<vmem>>, vector<1x12x1xf32>
    %42 = vector.shape_cast %41 : vector<1x12x1xf32> to vector<12x1xf32>
    %43 = vector.broadcast %42 : vector<12x1xf32> to vector<12x512xf32>
    %44 = arith.mulf %1, %43 : vector<12x512xf32>
    %45 = arith.addf %40, %44 : vector<12x512xf32>
    %c511_i32 = arith.constant 511 : i32
    %46 = tpu.dynamic_rotate %1 by %c511_i32 dim 1 : vector<12x512xf32>, i32 -> vector<12x512xf32>
    %c5 = arith.constant 5 : index
    %c0_24 = arith.constant 0 : index
    %c0_25 = arith.constant 0 : index
    %47 = vector.load %arg1[%c5, %c0_24, %c0_25] : memref<9x1x512xf32, #tpu.memory_space<vmem>>, vector<1x1x512xf32>
    %48 = vector.shape_cast %47 : vector<1x1x512xf32> to vector<1x512xf32>
    %49 = vector.broadcast %48 : vector<1x512xf32> to vector<12x512xf32>
    %50 = arith.mulf %46, %49 : vector<12x512xf32>
    %c5_26 = arith.constant 5 : index
    %c0_27 = arith.constant 0 : index
    %c0_28 = arith.constant 0 : index
    %51 = vector.load %arg2[%c5_26, %c0_27, %c0_28] : memref<9x12x1xf32, #tpu.memory_space<vmem>>, vector<1x12x1xf32>
    %52 = vector.shape_cast %51 : vector<1x12x1xf32> to vector<12x1xf32>
    %53 = vector.broadcast %52 : vector<12x1xf32> to vector<12x512xf32>
    %54 = arith.mulf %50, %53 : vector<12x512xf32>
    %55 = arith.addf %45, %54 : vector<12x512xf32>
    %c497_i32 = arith.constant 497 : i32
    %56 = tpu.dynamic_rotate %1 by %c497_i32 dim 1 : vector<12x512xf32>, i32 -> vector<12x512xf32>
    %c6 = arith.constant 6 : index
    %c0_29 = arith.constant 0 : index
    %c0_30 = arith.constant 0 : index
    %57 = vector.load %arg1[%c6, %c0_29, %c0_30] : memref<9x1x512xf32, #tpu.memory_space<vmem>>, vector<1x1x512xf32>
    %58 = vector.shape_cast %57 : vector<1x1x512xf32> to vector<1x512xf32>
    %59 = vector.broadcast %58 : vector<1x512xf32> to vector<12x512xf32>
    %60 = arith.mulf %56, %59 : vector<12x512xf32>
    %c6_31 = arith.constant 6 : index
    %c0_32 = arith.constant 0 : index
    %c0_33 = arith.constant 0 : index
    %61 = vector.load %arg2[%c6_31, %c0_32, %c0_33] : memref<9x12x1xf32, #tpu.memory_space<vmem>>, vector<1x12x1xf32>
    %62 = vector.shape_cast %61 : vector<1x12x1xf32> to vector<12x1xf32>
    %63 = vector.broadcast %62 : vector<12x1xf32> to vector<12x512xf32>
    %64 = arith.mulf %60, %63 : vector<12x512xf32>
    %65 = arith.addf %55, %64 : vector<12x512xf32>
    %c496_i32 = arith.constant 496 : i32
    %66 = tpu.dynamic_rotate %1 by %c496_i32 dim 1 : vector<12x512xf32>, i32 -> vector<12x512xf32>
    %c7 = arith.constant 7 : index
    %c0_34 = arith.constant 0 : index
    %c0_35 = arith.constant 0 : index
    %67 = vector.load %arg1[%c7, %c0_34, %c0_35] : memref<9x1x512xf32, #tpu.memory_space<vmem>>, vector<1x1x512xf32>
    %68 = vector.shape_cast %67 : vector<1x1x512xf32> to vector<1x512xf32>
    %69 = vector.broadcast %68 : vector<1x512xf32> to vector<12x512xf32>
    %70 = arith.mulf %66, %69 : vector<12x512xf32>
    %c7_36 = arith.constant 7 : index
    %c0_37 = arith.constant 0 : index
    %c0_38 = arith.constant 0 : index
    %71 = vector.load %arg2[%c7_36, %c0_37, %c0_38] : memref<9x12x1xf32, #tpu.memory_space<vmem>>, vector<1x12x1xf32>
    %72 = vector.shape_cast %71 : vector<1x12x1xf32> to vector<12x1xf32>
    %73 = vector.broadcast %72 : vector<12x1xf32> to vector<12x512xf32>
    %74 = arith.mulf %70, %73 : vector<12x512xf32>
    %75 = arith.addf %65, %74 : vector<12x512xf32>
    %c495_i32 = arith.constant 495 : i32
    %76 = tpu.dynamic_rotate %1 by %c495_i32 dim 1 : vector<12x512xf32>, i32 -> vector<12x512xf32>
    %c8 = arith.constant 8 : index
    %c0_39 = arith.constant 0 : index
    %c0_40 = arith.constant 0 : index
    %77 = vector.load %arg1[%c8, %c0_39, %c0_40] : memref<9x1x512xf32, #tpu.memory_space<vmem>>, vector<1x1x512xf32>
    %78 = vector.shape_cast %77 : vector<1x1x512xf32> to vector<1x512xf32>
    %79 = vector.broadcast %78 : vector<1x512xf32> to vector<12x512xf32>
    %80 = arith.mulf %76, %79 : vector<12x512xf32>
    %c8_41 = arith.constant 8 : index
    %c0_42 = arith.constant 0 : index
    %c0_43 = arith.constant 0 : index
    %81 = vector.load %arg2[%c8_41, %c0_42, %c0_43] : memref<9x12x1xf32, #tpu.memory_space<vmem>>, vector<1x12x1xf32>
    %82 = vector.shape_cast %81 : vector<1x12x1xf32> to vector<12x1xf32>
    %83 = vector.broadcast %82 : vector<12x1xf32> to vector<12x512xf32>
    %84 = arith.mulf %80, %83 : vector<12x512xf32>
    %85 = arith.addf %75, %84 : vector<12x512xf32>
    %c0_44 = arith.constant 0 : index
    %c0_45 = arith.constant 0 : index
    %86 = vector.load %arg3[%c0_44, %c0_45] : memref<12x1xf32, #tpu.memory_space<vmem>>, vector<12x1xf32>
    %c0_46 = arith.constant 0 : index
    %c0_47 = arith.constant 0 : index
    %87 = vector.load %arg4[%c0_46, %c0_47] : memref<12x1xf32, #tpu.memory_space<vmem>>, vector<12x1xf32>
    %cst = arith.constant dense<0.000000e+00> : vector<12xf32>
    %88 = vector.multi_reduction <add>, %85, %cst [1] : vector<12x512xf32> to vector<12xf32>
    %89 = vector.shape_cast %88 : vector<12xf32> to vector<12x1xf32>
    %cst_48 = arith.constant 5.120000e+02 : f32
    %90 = vector.broadcast %cst_48 : f32 to vector<12x1xf32>
    %91 = arith.divf %89, %90 : vector<12x1xf32>
    %92 = vector.broadcast %91 : vector<12x1xf32> to vector<12x512xf32>
    %93 = arith.subf %85, %92 : vector<12x512xf32>
    %94 = arith.mulf %93, %93 : vector<12x512xf32>
    %cst_49 = arith.constant dense<0.000000e+00> : vector<12xf32>
    %95 = vector.multi_reduction <add>, %94, %cst_49 [1] : vector<12x512xf32> to vector<12xf32>
    %96 = vector.shape_cast %95 : vector<12xf32> to vector<12x1xf32>
    %cst_50 = arith.constant 5.120000e+02 : f32
    %97 = vector.broadcast %cst_50 : f32 to vector<12x1xf32>
    %98 = arith.divf %96, %97 : vector<12x1xf32>
    %cst_51 = arith.constant 9.99999974E-6 : f32
    %99 = vector.broadcast %cst_51 : f32 to vector<12x1xf32>
    %100 = arith.addf %98, %99 : vector<12x1xf32>
    %101 = math.rsqrt %100 : vector<12x1xf32>
    %102 = arith.mulf %86, %101 : vector<12x1xf32>
    %103 = vector.broadcast %102 : vector<12x1xf32> to vector<12x512xf32>
    %104 = arith.mulf %85, %103 : vector<12x512xf32>
    %105 = arith.mulf %91, %102 : vector<12x1xf32>
    %106 = arith.subf %87, %105 : vector<12x1xf32>
    %107 = vector.broadcast %106 : vector<12x1xf32> to vector<12x512xf32>
    %108 = arith.addf %104, %107 : vector<12x512xf32>
    %c0_52 = arith.constant 0 : index
    %c0_53 = arith.constant 0 : index
    %109 = vector.load %arg5[%c0_52, %c0_53] : memref<24x12xbf16, #tpu.memory_space<vmem>>, vector<24x12xbf16>
    %110 = arith.truncf %108 : vector<12x512xf32> to vector<12x512xbf16>
    %cst_54 = arith.constant dense<0.000000e+00> : vector<24x512xf32>
    %111 = tpu.matmul %109, %110, %cst_54 {dimension_numbers = #tpu.dot_dimension_numbers<[1], [0], [0], [1], [0, 0, 1, 1], [], []>} : vector<24x12xbf16>, vector<12x512xbf16>, vector<24x512xf32> -> vector<24x512xf32>
    %c0_55 = arith.constant 0 : index
    %c0_56 = arith.constant 0 : index
    %112 = vector.load %arg6[%c0_55, %c0_56] : memref<24x1xf32, #tpu.memory_space<vmem>>, vector<24x1xf32>
    %c0_57 = arith.constant 0 : index
    %c0_58 = arith.constant 0 : index
    %113 = vector.load %arg7[%c0_57, %c0_58] : memref<24x1xf32, #tpu.memory_space<vmem>>, vector<24x1xf32>
    %cst_59 = arith.constant dense<0.000000e+00> : vector<24xf32>
    %114 = vector.multi_reduction <add>, %111, %cst_59 [1] : vector<24x512xf32> to vector<24xf32>
    %115 = vector.shape_cast %114 : vector<24xf32> to vector<24x1xf32>
    %cst_60 = arith.constant 5.120000e+02 : f32
    %116 = vector.broadcast %cst_60 : f32 to vector<24x1xf32>
    %117 = arith.divf %115, %116 : vector<24x1xf32>
    %118 = vector.broadcast %117 : vector<24x1xf32> to vector<24x512xf32>
    %119 = arith.subf %111, %118 : vector<24x512xf32>
    %120 = arith.mulf %119, %119 : vector<24x512xf32>
    %cst_61 = arith.constant dense<0.000000e+00> : vector<24xf32>
    %121 = vector.multi_reduction <add>, %120, %cst_61 [1] : vector<24x512xf32> to vector<24xf32>
    %122 = vector.shape_cast %121 : vector<24xf32> to vector<24x1xf32>
    %cst_62 = arith.constant 5.120000e+02 : f32
    %123 = vector.broadcast %cst_62 : f32 to vector<24x1xf32>
    %124 = arith.divf %122, %123 : vector<24x1xf32>
    %cst_63 = arith.constant 9.99999974E-6 : f32
    %125 = vector.broadcast %cst_63 : f32 to vector<24x1xf32>
    %126 = arith.addf %124, %125 : vector<24x1xf32>
    %127 = math.rsqrt %126 : vector<24x1xf32>
    %128 = arith.mulf %112, %127 : vector<24x1xf32>
    %129 = vector.broadcast %128 : vector<24x1xf32> to vector<24x512xf32>
    %130 = arith.mulf %111, %129 : vector<24x512xf32>
    %131 = arith.mulf %117, %128 : vector<24x1xf32>
    %132 = arith.subf %113, %131 : vector<24x1xf32>
    %133 = vector.broadcast %132 : vector<24x1xf32> to vector<24x512xf32>
    %134 = arith.addf %130, %133 : vector<24x512xf32>
    %cst_64 = arith.constant 0.000000e+00 : f32
    %135 = vector.broadcast %cst_64 : f32 to vector<24x512xf32>
    %136 = arith.maximumf %134, %135 : vector<24x512xf32>
    %137 = arith.truncf %136 : vector<24x512xf32> to vector<24x512xbf16>
    %138 = arith.extf %137 : vector<24x512xbf16> to vector<24x512xf32>
    %c17_i32_65 = arith.constant 17 : i32
    %139 = tpu.dynamic_rotate %138 by %c17_i32_65 dim 1 : vector<24x512xf32>, i32 -> vector<24x512xf32>
    %c0_66 = arith.constant 0 : index
    %c0_67 = arith.constant 0 : index
    %c0_68 = arith.constant 0 : index
    %140 = vector.load %arg1[%c0_66, %c0_67, %c0_68] : memref<9x1x512xf32, #tpu.memory_space<vmem>>, vector<1x1x512xf32>
    %141 = vector.shape_cast %140 : vector<1x1x512xf32> to vector<1x512xf32>
    %142 = vector.broadcast %141 : vector<1x512xf32> to vector<24x512xf32>
    %143 = arith.mulf %139, %142 : vector<24x512xf32>
    %c0_69 = arith.constant 0 : index
    %c0_70 = arith.constant 0 : index
    %c0_71 = arith.constant 0 : index
    %144 = vector.load %arg8[%c0_69, %c0_70, %c0_71] : memref<9x24x1xf32, #tpu.memory_space<vmem>>, vector<1x24x1xf32>
    %145 = vector.shape_cast %144 : vector<1x24x1xf32> to vector<24x1xf32>
    %146 = vector.broadcast %145 : vector<24x1xf32> to vector<24x512xf32>
    %147 = arith.mulf %143, %146 : vector<24x512xf32>
    %c16_i32_72 = arith.constant 16 : i32
    %148 = tpu.dynamic_rotate %138 by %c16_i32_72 dim 1 : vector<24x512xf32>, i32 -> vector<24x512xf32>
    %c1_73 = arith.constant 1 : index
    %c0_74 = arith.constant 0 : index
    %c0_75 = arith.constant 0 : index
    %149 = vector.load %arg1[%c1_73, %c0_74, %c0_75] : memref<9x1x512xf32, #tpu.memory_space<vmem>>, vector<1x1x512xf32>
    %150 = vector.shape_cast %149 : vector<1x1x512xf32> to vector<1x512xf32>
    %151 = vector.broadcast %150 : vector<1x512xf32> to vector<24x512xf32>
    %152 = arith.mulf %148, %151 : vector<24x512xf32>
    %c1_76 = arith.constant 1 : index
    %c0_77 = arith.constant 0 : index
    %c0_78 = arith.constant 0 : index
    %153 = vector.load %arg8[%c1_76, %c0_77, %c0_78] : memref<9x24x1xf32, #tpu.memory_space<vmem>>, vector<1x24x1xf32>
    %154 = vector.shape_cast %153 : vector<1x24x1xf32> to vector<24x1xf32>
    %155 = vector.broadcast %154 : vector<24x1xf32> to vector<24x512xf32>
    %156 = arith.mulf %152, %155 : vector<24x512xf32>
    %157 = arith.addf %147, %156 : vector<24x512xf32>
    %c15_i32_79 = arith.constant 15 : i32
    %158 = tpu.dynamic_rotate %138 by %c15_i32_79 dim 1 : vector<24x512xf32>, i32 -> vector<24x512xf32>
    %c2_80 = arith.constant 2 : index
    %c0_81 = arith.constant 0 : index
    %c0_82 = arith.constant 0 : index
    %159 = vector.load %arg1[%c2_80, %c0_81, %c0_82] : memref<9x1x512xf32, #tpu.memory_space<vmem>>, vector<1x1x512xf32>
    %160 = vector.shape_cast %159 : vector<1x1x512xf32> to vector<1x512xf32>
    %161 = vector.broadcast %160 : vector<1x512xf32> to vector<24x512xf32>
    %162 = arith.mulf %158, %161 : vector<24x512xf32>
    %c2_83 = arith.constant 2 : index
    %c0_84 = arith.constant 0 : index
    %c0_85 = arith.constant 0 : index
    %163 = vector.load %arg8[%c2_83, %c0_84, %c0_85] : memref<9x24x1xf32, #tpu.memory_space<vmem>>, vector<1x24x1xf32>
    %164 = vector.shape_cast %163 : vector<1x24x1xf32> to vector<24x1xf32>
    %165 = vector.broadcast %164 : vector<24x1xf32> to vector<24x512xf32>
    %166 = arith.mulf %162, %165 : vector<24x512xf32>
    %167 = arith.addf %157, %166 : vector<24x512xf32>
    %c1_i32_86 = arith.constant 1 : i32
    %168 = tpu.dynamic_rotate %138 by %c1_i32_86 dim 1 : vector<24x512xf32>, i32 -> vector<24x512xf32>
    %c3_87 = arith.constant 3 : index
    %c0_88 = arith.constant 0 : index
    %c0_89 = arith.constant 0 : index
    %169 = vector.load %arg1[%c3_87, %c0_88, %c0_89] : memref<9x1x512xf32, #tpu.memory_space<vmem>>, vector<1x1x512xf32>
    %170 = vector.shape_cast %169 : vector<1x1x512xf32> to vector<1x512xf32>
    %171 = vector.broadcast %170 : vector<1x512xf32> to vector<24x512xf32>
    %172 = arith.mulf %168, %171 : vector<24x512xf32>
    %c3_90 = arith.constant 3 : index
    %c0_91 = arith.constant 0 : index
    %c0_92 = arith.constant 0 : index
    %173 = vector.load %arg8[%c3_90, %c0_91, %c0_92] : memref<9x24x1xf32, #tpu.memory_space<vmem>>, vector<1x24x1xf32>
    %174 = vector.shape_cast %173 : vector<1x24x1xf32> to vector<24x1xf32>
    %175 = vector.broadcast %174 : vector<24x1xf32> to vector<24x512xf32>
    %176 = arith.mulf %172, %175 : vector<24x512xf32>
    %177 = arith.addf %167, %176 : vector<24x512xf32>
    %c4_93 = arith.constant 4 : index
    %c0_94 = arith.constant 0 : index
    %c0_95 = arith.constant 0 : index
    %178 = vector.load %arg8[%c4_93, %c0_94, %c0_95] : memref<9x24x1xf32, #tpu.memory_space<vmem>>, vector<1x24x1xf32>
    %179 = vector.shape_cast %178 : vector<1x24x1xf32> to vector<24x1xf32>
    %180 = vector.broadcast %179 : vector<24x1xf32> to vector<24x512xf32>
    %181 = arith.mulf %138, %180 : vector<24x512xf32>
    %182 = arith.addf %177, %181 : vector<24x512xf32>
    %c511_i32_96 = arith.constant 511 : i32
    %183 = tpu.dynamic_rotate %138 by %c511_i32_96 dim 1 : vector<24x512xf32>, i32 -> vector<24x512xf32>
    %c5_97 = arith.constant 5 : index
    %c0_98 = arith.constant 0 : index
    %c0_99 = arith.constant 0 : index
    %184 = vector.load %arg1[%c5_97, %c0_98, %c0_99] : memref<9x1x512xf32, #tpu.memory_space<vmem>>, vector<1x1x512xf32>
    %185 = vector.shape_cast %184 : vector<1x1x512xf32> to vector<1x512xf32>
    %186 = vector.broadcast %185 : vector<1x512xf32> to vector<24x512xf32>
    %187 = arith.mulf %183, %186 : vector<24x512xf32>
    %c5_100 = arith.constant 5 : index
    %c0_101 = arith.constant 0 : index
    %c0_102 = arith.constant 0 : index
    %188 = vector.load %arg8[%c5_100, %c0_101, %c0_102] : memref<9x24x1xf32, #tpu.memory_space<vmem>>, vector<1x24x1xf32>
    %189 = vector.shape_cast %188 : vector<1x24x1xf32> to vector<24x1xf32>
    %190 = vector.broadcast %189 : vector<24x1xf32> to vector<24x512xf32>
    %191 = arith.mulf %187, %190 : vector<24x512xf32>
    %192 = arith.addf %182, %191 : vector<24x512xf32>
    %c497_i32_103 = arith.constant 497 : i32
    %193 = tpu.dynamic_rotate %138 by %c497_i32_103 dim 1 : vector<24x512xf32>, i32 -> vector<24x512xf32>
    %c6_104 = arith.constant 6 : index
    %c0_105 = arith.constant 0 : index
    %c0_106 = arith.constant 0 : index
    %194 = vector.load %arg1[%c6_104, %c0_105, %c0_106] : memref<9x1x512xf32, #tpu.memory_space<vmem>>, vector<1x1x512xf32>
    %195 = vector.shape_cast %194 : vector<1x1x512xf32> to vector<1x512xf32>
    %196 = vector.broadcast %195 : vector<1x512xf32> to vector<24x512xf32>
    %197 = arith.mulf %193, %196 : vector<24x512xf32>
    %c6_107 = arith.constant 6 : index
    %c0_108 = arith.constant 0 : index
    %c0_109 = arith.constant 0 : index
    %198 = vector.load %arg8[%c6_107, %c0_108, %c0_109] : memref<9x24x1xf32, #tpu.memory_space<vmem>>, vector<1x24x1xf32>
    %199 = vector.shape_cast %198 : vector<1x24x1xf32> to vector<24x1xf32>
    %200 = vector.broadcast %199 : vector<24x1xf32> to vector<24x512xf32>
    %201 = arith.mulf %197, %200 : vector<24x512xf32>
    %202 = arith.addf %192, %201 : vector<24x512xf32>
    %c496_i32_110 = arith.constant 496 : i32
    %203 = tpu.dynamic_rotate %138 by %c496_i32_110 dim 1 : vector<24x512xf32>, i32 -> vector<24x512xf32>
    %c7_111 = arith.constant 7 : index
    %c0_112 = arith.constant 0 : index
    %c0_113 = arith.constant 0 : index
    %204 = vector.load %arg1[%c7_111, %c0_112, %c0_113] : memref<9x1x512xf32, #tpu.memory_space<vmem>>, vector<1x1x512xf32>
    %205 = vector.shape_cast %204 : vector<1x1x512xf32> to vector<1x512xf32>
    %206 = vector.broadcast %205 : vector<1x512xf32> to vector<24x512xf32>
    %207 = arith.mulf %203, %206 : vector<24x512xf32>
    %c7_114 = arith.constant 7 : index
    %c0_115 = arith.constant 0 : index
    %c0_116 = arith.constant 0 : index
    %208 = vector.load %arg8[%c7_114, %c0_115, %c0_116] : memref<9x24x1xf32, #tpu.memory_space<vmem>>, vector<1x24x1xf32>
    %209 = vector.shape_cast %208 : vector<1x24x1xf32> to vector<24x1xf32>
    %210 = vector.broadcast %209 : vector<24x1xf32> to vector<24x512xf32>
    %211 = arith.mulf %207, %210 : vector<24x512xf32>
    %212 = arith.addf %202, %211 : vector<24x512xf32>
    %c495_i32_117 = arith.constant 495 : i32
    %213 = tpu.dynamic_rotate %138 by %c495_i32_117 dim 1 : vector<24x512xf32>, i32 -> vector<24x512xf32>
    %c8_118 = arith.constant 8 : index
    %c0_119 = arith.constant 0 : index
    %c0_120 = arith.constant 0 : index
    %214 = vector.load %arg1[%c8_118, %c0_119, %c0_120] : memref<9x1x512xf32, #tpu.memory_space<vmem>>, vector<1x1x512xf32>
    %215 = vector.shape_cast %214 : vector<1x1x512xf32> to vector<1x512xf32>
    %216 = vector.broadcast %215 : vector<1x512xf32> to vector<24x512xf32>
    %217 = arith.mulf %213, %216 : vector<24x512xf32>
    %c8_121 = arith.constant 8 : index
    %c0_122 = arith.constant 0 : index
    %c0_123 = arith.constant 0 : index
    %218 = vector.load %arg8[%c8_121, %c0_122, %c0_123] : memref<9x24x1xf32, #tpu.memory_space<vmem>>, vector<1x24x1xf32>
    %219 = vector.shape_cast %218 : vector<1x24x1xf32> to vector<24x1xf32>
    %220 = vector.broadcast %219 : vector<24x1xf32> to vector<24x512xf32>
    %221 = arith.mulf %217, %220 : vector<24x512xf32>
    %222 = arith.addf %212, %221 : vector<24x512xf32>
    %c0_124 = arith.constant 0 : index
    %c0_125 = arith.constant 0 : index
    %223 = vector.load %arg9[%c0_124, %c0_125] : memref<24x1xf32, #tpu.memory_space<vmem>>, vector<24x1xf32>
    %c0_126 = arith.constant 0 : index
    %c0_127 = arith.constant 0 : index
    %224 = vector.load %arg10[%c0_126, %c0_127] : memref<24x1xf32, #tpu.memory_space<vmem>>, vector<24x1xf32>
    %cst_128 = arith.constant dense<0.000000e+00> : vector<24xf32>
    %225 = vector.multi_reduction <add>, %222, %cst_128 [1] : vector<24x512xf32> to vector<24xf32>
    %226 = vector.shape_cast %225 : vector<24xf32> to vector<24x1xf32>
    %cst_129 = arith.constant 5.120000e+02 : f32
    %227 = vector.broadcast %cst_129 : f32 to vector<24x1xf32>
    %228 = arith.divf %226, %227 : vector<24x1xf32>
    %229 = vector.broadcast %228 : vector<24x1xf32> to vector<24x512xf32>
    %230 = arith.subf %222, %229 : vector<24x512xf32>
    %231 = arith.mulf %230, %230 : vector<24x512xf32>
    %cst_130 = arith.constant dense<0.000000e+00> : vector<24xf32>
    %232 = vector.multi_reduction <add>, %231, %cst_130 [1] : vector<24x512xf32> to vector<24xf32>
    %233 = vector.shape_cast %232 : vector<24xf32> to vector<24x1xf32>
    %cst_131 = arith.constant 5.120000e+02 : f32
    %234 = vector.broadcast %cst_131 : f32 to vector<24x1xf32>
    %235 = arith.divf %233, %234 : vector<24x1xf32>
    %cst_132 = arith.constant 9.99999974E-6 : f32
    %236 = vector.broadcast %cst_132 : f32 to vector<24x1xf32>
    %237 = arith.addf %235, %236 : vector<24x1xf32>
    %238 = math.rsqrt %237 : vector<24x1xf32>
    %239 = arith.mulf %223, %238 : vector<24x1xf32>
    %240 = vector.broadcast %239 : vector<24x1xf32> to vector<24x512xf32>
    %241 = arith.mulf %222, %240 : vector<24x512xf32>
    %242 = arith.mulf %228, %239 : vector<24x1xf32>
    %243 = arith.subf %224, %242 : vector<24x1xf32>
    %244 = vector.broadcast %243 : vector<24x1xf32> to vector<24x512xf32>
    %245 = arith.addf %241, %244 : vector<24x512xf32>
    %c0_133 = arith.constant 0 : index
    %c0_134 = arith.constant 0 : index
    %246 = vector.load %arg11[%c0_133, %c0_134] : memref<24x24xbf16, #tpu.memory_space<vmem>>, vector<24x24xbf16>
    %247 = arith.truncf %245 : vector<24x512xf32> to vector<24x512xbf16>
    %cst_135 = arith.constant dense<0.000000e+00> : vector<24x512xf32>
    %248 = tpu.matmul %246, %247, %cst_135 {dimension_numbers = #tpu.dot_dimension_numbers<[1], [0], [0], [1], [0, 0, 1, 1], [], []>} : vector<24x24xbf16>, vector<24x512xbf16>, vector<24x512xf32> -> vector<24x512xf32>
    %c0_136 = arith.constant 0 : index
    %c0_137 = arith.constant 0 : index
    %249 = vector.load %arg12[%c0_136, %c0_137] : memref<24x1xf32, #tpu.memory_space<vmem>>, vector<24x1xf32>
    %c0_138 = arith.constant 0 : index
    %c0_139 = arith.constant 0 : index
    %250 = vector.load %arg13[%c0_138, %c0_139] : memref<24x1xf32, #tpu.memory_space<vmem>>, vector<24x1xf32>
    %cst_140 = arith.constant dense<0.000000e+00> : vector<24xf32>
    %251 = vector.multi_reduction <add>, %248, %cst_140 [1] : vector<24x512xf32> to vector<24xf32>
    %252 = vector.shape_cast %251 : vector<24xf32> to vector<24x1xf32>
    %cst_141 = arith.constant 5.120000e+02 : f32
    %253 = vector.broadcast %cst_141 : f32 to vector<24x1xf32>
    %254 = arith.divf %252, %253 : vector<24x1xf32>
    %255 = vector.broadcast %254 : vector<24x1xf32> to vector<24x512xf32>
    %256 = arith.subf %248, %255 : vector<24x512xf32>
    %257 = arith.mulf %256, %256 : vector<24x512xf32>
    %cst_142 = arith.constant dense<0.000000e+00> : vector<24xf32>
    %258 = vector.multi_reduction <add>, %257, %cst_142 [1] : vector<24x512xf32> to vector<24xf32>
    %259 = vector.shape_cast %258 : vector<24xf32> to vector<24x1xf32>
    %cst_143 = arith.constant 5.120000e+02 : f32
    %260 = vector.broadcast %cst_143 : f32 to vector<24x1xf32>
    %261 = arith.divf %259, %260 : vector<24x1xf32>
    %cst_144 = arith.constant 9.99999974E-6 : f32
    %262 = vector.broadcast %cst_144 : f32 to vector<24x1xf32>
    %263 = arith.addf %261, %262 : vector<24x1xf32>
    %264 = math.rsqrt %263 : vector<24x1xf32>
    %265 = arith.mulf %249, %264 : vector<24x1xf32>
    %266 = vector.broadcast %265 : vector<24x1xf32> to vector<24x512xf32>
    %267 = arith.mulf %248, %266 : vector<24x512xf32>
    %268 = arith.mulf %254, %265 : vector<24x1xf32>
    %269 = arith.subf %250, %268 : vector<24x1xf32>
    %270 = vector.broadcast %269 : vector<24x1xf32> to vector<24x512xf32>
    %271 = arith.addf %267, %270 : vector<24x512xf32>
    %cst_145 = arith.constant 0.000000e+00 : f32
    %272 = vector.broadcast %cst_145 : f32 to vector<24x512xf32>
    %273 = arith.maximumf %271, %272 : vector<24x512xf32>
    %c0_146 = arith.constant 0 : index
    %c0_147 = arith.constant 0 : index
    %274 = vector.load %arg14[%c0_146, %c0_147] : memref<6x24xbf16, #tpu.memory_space<vmem>>, vector<6x24xbf16>
    %275 = arith.truncf %273 : vector<24x512xf32> to vector<24x512xbf16>
    %cst_148 = arith.constant dense<0.000000e+00> : vector<6x512xf32>
    %276 = tpu.matmul %274, %275, %cst_148 {dimension_numbers = #tpu.dot_dimension_numbers<[1], [0], [0], [1], [0, 0, 1, 1], [], []>} : vector<6x24xbf16>, vector<24x512xbf16>, vector<6x512xf32> -> vector<6x512xf32>
    %c0_149 = arith.constant 0 : index
    %c0_150 = arith.constant 0 : index
    %277 = vector.load %arg15[%c0_149, %c0_150] : memref<6x1xf32, #tpu.memory_space<vmem>>, vector<6x1xf32>
    %278 = vector.broadcast %277 : vector<6x1xf32> to vector<6x512xf32>
    %279 = arith.addf %276, %278 : vector<6x512xf32>
    %cst_151 = arith.constant 0.000000e+00 : f32
    %280 = vector.broadcast %cst_151 : f32 to vector<6x512xf32>
    %281 = arith.subf %280, %279 : vector<6x512xf32>
    %282 = math.exp %281 : vector<6x512xf32>
    %cst_152 = arith.constant 1.000000e+00 : f32
    %283 = vector.broadcast %cst_152 : f32 to vector<6x512xf32>
    %284 = arith.addf %283, %282 : vector<6x512xf32>
    %cst_153 = arith.constant 1.000000e+00 : f32
    %285 = vector.broadcast %cst_153 : f32 to vector<6x512xf32>
    %286 = arith.divf %285, %284 : vector<6x512xf32>
    %c0_154 = arith.constant 0 : index
    %c0_155 = arith.constant 0 : index
    %287 = vector.load %arg16[%c0_154, %c0_155] : memref<6x1xf32, #tpu.memory_space<vmem>>, vector<6x1xf32>
    %cst_156 = arith.constant 5.000000e-01 : f32
    %288 = vector.broadcast %cst_156 : f32 to vector<6x1xf32>
    %289 = arith.cmpf ogt, %287, %288 : vector<6x1xf32>
    %290 = vector.shape_cast %289 : vector<6x1xi1> to vector<6x1xi1>
    %291 = vector.broadcast %290 : vector<6x1xi1> to vector<6x512xi1>
    %292 = arith.select %291, %286, %279 : vector<6x512xi1>, vector<6x512xf32>
    %c0_157 = arith.constant 0 : index
    %c0_158 = arith.constant 0 : index
    %293 = vector.load %arg17[%c0_157, %c0_158] : memref<6x512xf32, #tpu.memory_space<vmem>>, vector<6x512xf32>
    tpu.vector_store %arg17[%c0_157, %c0_158], %292 {strides = array<i32>} : memref<6x512xf32, #tpu.memory_space<vmem>>, vector<6x512xf32>,
    return
  }
}

</mosaic_0001>

<llo_original>
// kernel: head_forward.1
$region0: #{head_forward.1}
  #allocation0 [shape = 'u32[]', space=smem, size = 0x4, offset = 0x4, fixed_abs, tag = 'smem constant byte address 0x4 - core index']
  #allocation1 [shape = 'u32[144,128]{1,0:T(1,128)}', space=vmem, size = 0x12000, scoped, tag = 'internal scratch']
  %s0 = inlined_call_operand.vmem [shape: bf16[12,512], index: 0, kind: input, shape index: {}]
  %s1 = inlined_call_operand.vmem [shape: f32[9,1,512], index: 1, kind: input, shape index: {}]
  %s2 = inlined_call_operand.vmem [shape: f32[9,12,1], index: 2, kind: input, shape index: {}]
  %s3 = inlined_call_operand.vmem [shape: f32[12,1], index: 3, kind: input, shape index: {}]
  %s4 = inlined_call_operand.vmem [shape: f32[12,1], index: 4, kind: input, shape index: {}]
  %s5 = inlined_call_operand.vmem [shape: bf16[24,12], index: 5, kind: input, shape index: {}]
  %s6 = inlined_call_operand.vmem [shape: f32[24,1], index: 6, kind: input, shape index: {}]
  %s7 = inlined_call_operand.vmem [shape: f32[24,1], index: 7, kind: input, shape index: {}]
  %s8 = inlined_call_operand.vmem [shape: f32[9,24,1], index: 8, kind: input, shape index: {}]
  %s9 = inlined_call_operand.vmem [shape: f32[24,1], index: 9, kind: input, shape index: {}]
  %s10 = inlined_call_operand.vmem [shape: f32[24,1], index: 10, kind: input, shape index: {}]
  %s11 = inlined_call_operand.vmem [shape: bf16[24,24], index: 11, kind: input, shape index: {}]
  %s12 = inlined_call_operand.vmem [shape: f32[24,1], index: 12, kind: input, shape index: {}]
  %s13 = inlined_call_operand.vmem [shape: f32[24,1], index: 13, kind: input, shape index: {}]
  %s14 = inlined_call_operand.vmem [shape: bf16[6,24], index: 14, kind: input, shape index: {}]
  %s15 = inlined_call_operand.vmem [shape: f32[6,1], index: 15, kind: input, shape index: {}]
  %s16 = inlined_call_operand.vmem [shape: f32[6,1], index: 16, kind: input, shape index: {}]
  %s17 = inlined_call_operand.vmem [shape: f32[6,512], index: 17, kind: output, shape index: {}]
  %s18 = sld [smem:[#allocation0]]
  $region78: #{head_forward.1} parent=0
    _
  %s20 = ssub.s32 1, %s18
  %s21 = scalar_select 0, %s20, %s18
  // Predicated region
  $region2: #{head_forward.1} parent=0 // pred_check
    _
  $region3: #{head_forward.1} parent=0 // pred_check_branch
    %23 = sbr.rel (0) target = $region5
  $region4: #{head_forward.1} parent=0 // pred_region
    _
  $region5: #{head_forward.1} parent=0 // pred_fallthru
    _
  // Predicated region
  $region6: #{head_forward.1} parent=0 // pred_check
    _
  $region7: #{head_forward.1} parent=0 // pred_check_branch
    %25 = sbr.rel (0) target = $region9
  $region8: #{head_forward.1} parent=0 // pred_region
    _
  $region9: #{head_forward.1} parent=0 // pred_fallthru
    _
  // Predicated region
  $region10: #{head_forward.1} parent=0 // pred_check
    _
  $region11: #{head_forward.1} parent=0 // pred_check_branch
    %27 = sbr.rel (0) target = $region13
  $region12: #{head_forward.1} parent=0 // pred_region
    _
  $region13: #{head_forward.1} parent=0 // pred_fallthru
    _
  // Predicated region
  $region14: #{head_forward.1} parent=0 // pred_check
    _
  $region15: #{head_forward.1} parent=0 // pred_check_branch
    %29 = sbr.rel (0) target = $region17
  $region16: #{head_forward.1} parent=0 // pred_region
    _
  $region17: #{head_forward.1} parent=0 // pred_fallthru
    _
  // Predicated region
  $region18: #{head_forward.1} parent=0 // pred_check
    _
  $region19: #{head_forward.1} parent=0 // pred_check_branch
    %31 = sbr.rel (0) target = $region21
  $region20: #{head_forward.1} parent=0 // pred_region
    _
  $region21: #{head_forward.1} parent=0 // pred_fallthru
    _
  // Predicated region
  $region22: #{head_forward.1} parent=0 // pred_check
    _
  $region23: #{head_forward.1} parent=0 // pred_check_branch
    %33 = sbr.rel (0) target = $region25
  $region24: #{head_forward.1} parent=0 // pred_region
    _
  $region25: #{head_forward.1} parent=0 // pred_fallthru
    _
  // Predicated region
  $region26: #{head_forward.1} parent=0 // pred_check
    _
  $region27: #{head_forward.1} parent=0 // pred_check_branch
    %35 = sbr.rel (0) target = $region29
  $region28: #{head_forward.1} parent=0 // pred_region
    _
  $region29: #{head_forward.1} parent=0 // pred_fallthru
    _
  // Predicated region
  $region30: #{head_forward.1} parent=0 // pred_check
    _
  $region31: #{head_forward.1} parent=0 // pred_check_branch
    %37 = sbr.rel (0) target = $region33
  $region32: #{head_forward.1} parent=0 // pred_region
    _
  $region33: #{head_forward.1} parent=0 // pred_fallthru
    _
  // Predicated region
  $region34: #{head_forward.1} parent=0 // pred_check
    _
  $region35: #{head_forward.1} parent=0 // pred_check_branch
    %39 = sbr.rel (0) target = $region37
  $region36: #{head_forward.1} parent=0 // pred_region
    _
  $region37: #{head_forward.1} parent=0 // pred_fallthru
    _
  // Predicated region
  $region38: #{head_forward.1} parent=0 // pred_check
    _
  $region39: #{head_forward.1} parent=0 // pred_check_branch
    %41 = sbr.rel (0) target = $region41
  $region40: #{head_forward.1} parent=0 // pred_region
    _
  $region41: #{head_forward.1} parent=0 // pred_fallthru
    _
  // Predicated region
  $region42: #{head_forward.1} parent=0 // pred_check
    _
  $region43: #{head_forward.1} parent=0 // pred_check_branch
    %43 = sbr.rel (0) target = $region45
  $region44: #{head_forward.1} parent=0 // pred_region
    _
  $region45: #{head_forward.1} parent=0 // pred_fallthru
    _
  // Predicated region
  $region46: #{head_forward.1} parent=0 // pred_check
    _
  $region47: #{head_forward.1} parent=0 // pred_check_branch
    %45 = sbr.rel (0) target = $region49
  $region48: #{head_forward.1} parent=0 // pred_region
    _
  $region49: #{head_forward.1} parent=0 // pred_fallthru
    _
  // Predicated region
  $region50: #{head_forward.1} parent=0 // pred_check
    _
  $region51: #{head_forward.1} parent=0 // pred_check_branch
    %47 = sbr.rel (0) target = $region53
  $region52: #{head_forward.1} parent=0 // pred_region
    _
  $region53: #{head_forward.1} parent=0 // pred_fallthru
    _
  // Predicated region
  $region54: #{head_forward.1} parent=0 // pred_check
    _
  $region55: #{head_forward.1} parent=0 // pred_check_branch
    %49 = sbr.rel (0) target = $region57
  $region56: #{head_forward.1} parent=0 // pred_region
    _
  $region57: #{head_forward.1} parent=0 // pred_fallthru
    _
  // Predicated region
  $region58: #{head_forward.1} parent=0 // pred_check
    _
  $region59: #{head_forward.1} parent=0 // pred_check_branch
    %51 = sbr.rel (0) target = $region61
  $region60: #{head_forward.1} parent=0 // pred_region
    _
  $region61: #{head_forward.1} parent=0 // pred_fallthru
    _
  // Predicated region
  $region62: #{head_forward.1} parent=0 // pred_check
    _
  $region63: #{head_forward.1} parent=0 // pred_check_branch
    %53 = sbr.rel (0) target = $region65
  $region64: #{head_forward.1} parent=0 // pred_region
    _
  $region65: #{head_forward.1} parent=0 // pred_fallthru
    _
  // Predicated region
  $region66: #{head_forward.1} parent=0 // pred_check
    _
  $region67: #{head_forward.1} parent=0 // pred_check_branch
    %55 = sbr.rel (0) target = $region69
  $region68: #{head_forward.1} parent=0 // pred_region
    _
  $region69: #{head_forward.1} parent=0 // pred_fallthru
    _
  %v57 = vld [vmem:[%s0] sm:$0xff]
  %v58 = vld [vmem:[%s0 + $0x8] sm:$0xff]
  %v59 = vld [vmem:[%s0 + $0x10] sm:$0x33]
  %v60 = vld [vmem:[%s0 + $0x18] sm:$0x33]
  %v61 = vunpack.c.l.bf16 %v57
  %v62 = vunpack.c.h.bf16 %v57
  %v63 = vunpack.c.l.bf16 %v58
  %v64 = vunpack.c.h.bf16 %v58
  %v65 = vunpack.c.l.bf16 %v59
  %v66 = vunpack.c.h.bf16 %v59
  %v67 = vunpack.c.l.bf16 %v60
  %v68 = vunpack.c.h.bf16 %v60
  %69 = vrot.lane.b32.xlu0 %v61, 17
  %v70 = vpop.permute.xlu0 %69
  %71 = vrot.lane.b32.xlu0 %v65, 17
  %v72 = vpop.permute.xlu0 %71
  %73 = vrot.lane.b32.xlu0 %v62, 17
  %v74 = vpop.permute.xlu0 %73
  %75 = vrot.lane.b32.xlu0 %v66, 17
  %v76 = vpop.permute.xlu0 %75
  %77 = vrot.lane.b32.xlu0 %v63, 17
  %v78 = vpop.permute.xlu0 %77
  %79 = vrot.lane.b32.xlu0 %v67, 17
  %v80 = vpop.permute.xlu0 %79
  %81 = vrot.lane.b32.xlu0 %v64, 17
  %v82 = vpop.permute.xlu0 %81
  %83 = vrot.lane.b32.xlu0 %v68, 17
  %v84 = vpop.permute.xlu0 %83
  %v85 = vlaneseq
  %v86 = vand.u32 %v85, 127
  %vm87 = vcmp.lt.s32.totalorder %v86, 17
  %v88 = vsel %vm87, %v78, %v82
  %v89 = vsel %vm87, %v80, %v84
  %v90 = vsel %vm87, %v74, %v78
  %v91 = vsel %vm87, %v76, %v80
  %v92 = vsel %vm87, %v70, %v74
  %v93 = vsel %vm87, %v72, %v76
  %v94 = vsel %vm87, %v82, %v70
  %v95 = vsel %vm87, %v84, %v72
  %v96 = vld [vmem:[%s1] sm:$0xf]
  %v98 = vlaneseq
  %v99 = vshrl.u32 %v98, 7
  %v100 = vsub.s32 0, %v99
  %v101 = vrot.slane %v96, %v100
  %v102 = vlaneseq
  %v103 = vshrl.u32 %v102, 7
  %v104 = vsub.s32 1, %v103
  %v105 = vrot.slane %v96, %v104
  %v106 = vlaneseq
  %v107 = vshrl.u32 %v106, 7
  %v108 = vsub.s32 2, %v107
  %v109 = vrot.slane %v96, %v108
  %v110 = vlaneseq
  %v111 = vshrl.u32 %v110, 7
  %v112 = vsub.s32 3, %v111
  %v113 = vrot.slane %v96, %v112
  %v118 = vmul.f32 %v94, %v101
  %v119 = vmul.f32 %v92, %v105
  %v120 = vmul.f32 %v90, %v109
  %v121 = vmul.f32 %v88, %v113
  %v122 = vmul.f32 %v95, %v101
  %v123 = vmul.f32 %v93, %v105
  %v124 = vmul.f32 %v91, %v109
  %v125 = vmul.f32 %v89, %v113
  %v126 = vld [vmem:[%s2] sm:$0xff]
  %v127 = vld [vmem:[%s2 + $0x8] sm:$0xf]
  %129 = vset.pattern.permute.xlu0 0
  %130 = vperm.xlu0 %129, %v126
  %v131 = vpop.permute.xlu0 %130
  %134 = vset.pattern.permute.xlu0 0
  %135 = vperm.xlu0 %134, %v127
  %v136 = vpop.permute.xlu0 %135
  %v138 = vmul.f32 %v118, %v131
  %v139 = vmul.f32 %v119, %v131
  %v140 = vmul.f32 %v120, %v131
  %v141 = vmul.f32 %v121, %v131
  %v142 = vmul.f32 %v122, %v136
  %v143 = vmul.f32 %v123, %v136
  %v144 = vmul.f32 %v124, %v136
  %v145 = vmul.f32 %v125, %v136
  %146 = vrot.lane.b32.xlu0 %v61, 16
  %v147 = vpop.permute.xlu0 %146
  %148 = vrot.lane.b32.xlu0 %v65, 16
  %v149 = vpop.permute.xlu0 %148
  %150 = vrot.lane.b32.xlu0 %v62, 16
  %v151 = vpop.permute.xlu0 %150
  %152 = vrot.lane.b32.xlu0 %v66, 16
  %v153 = vpop.permute.xlu0 %152
  %154 = vrot.lane.b32.xlu0 %v63, 16
  %v155 = vpop.permute.xlu0 %154
  %156 = vrot.lane.b32.xlu0 %v67, 16
  %v157 = vpop.permute.xlu0 %156
  %158 = vrot.lane.b32.xlu0 %v64, 16
  %v159 = vpop.permute.xlu0 %158
  %160 = vrot.lane.b32.xlu0 %v68, 16
  %v161 = vpop.permute.xlu0 %160
  %vm162 = vcmp.lt.s32.totalorder %v86, 16
  %v163 = vsel %vm162, %v155, %v159
  %v164 = vsel %vm162, %v157, %v161
  %v165 = vsel %vm162, %v151, %v155
  %v166 = vsel %vm162, %v153, %v157
  %v167 = vsel %vm162, %v147, %v151
  %v168 = vsel %vm162, %v149, %v153
  %v169 = vsel %vm162, %v159, %v147
  %v170 = vsel %vm162, %v161, %v149
  %s171 = scalar_lea.vmem %s1, 4
  %v172 = vld [vmem:[%s171] sm:$0xf]
  %v174 = vlaneseq
  %v175 = vshrl.u32 %v174, 7
  %v176 = vsub.s32 0, %v175
  %v177 = vrot.slane %v172, %v176
  %v178 = vlaneseq
  %v179 = vshrl.u32 %v178, 7
  %v180 = vsub.s32 1, %v179
  %v181 = vrot.slane %v172, %v180
  %v182 = vlaneseq
  %v183 = vshrl.u32 %v182, 7
  %v184 = vsub.s32 2, %v183
  %v185 = vrot.slane %v172, %v184
  %v186 = vlaneseq
  %v187 = vshrl.u32 %v186, 7
  %v188 = vsub.s32 3, %v187
  %v189 = vrot.slane %v172, %v188
  %v194 = vmul.f32 %v169, %v177
  %v195 = vmul.f32 %v167, %v181
  %v196 = vmul.f32 %v165, %v185
  %v197 = vmul.f32 %v163, %v189
  %v198 = vmul.f32 %v170, %v177
  %v199 = vmul.f32 %v168, %v181
  %v200 = vmul.f32 %v166, %v185
  %v201 = vmul.f32 %v164, %v189
  %s202 = scalar_lea.vmem %s2, 16
  %v203 = vld [vmem:[%s202] sm:$0xff]
  %v204 = vld [vmem:[%s202 + $0x8] sm:$0xf]
  %206 = vset.pattern.permute.xlu0 0
  %207 = vperm.xlu0 %206, %v203
  %v208 = vpop.permute.xlu0 %207
  %211 = vset.pattern.permute.xlu0 0
  %212 = vperm.xlu0 %211, %v204
  %v213 = vpop.permute.xlu0 %212
  %v215 = vmul.f32 %v194, %v208
  %v216 = vmul.f32 %v195, %v208
  %v217 = vmul.f32 %v196, %v208
  %v218 = vmul.f32 %v197, %v208
  %v219 = vmul.f32 %v198, %v213
  %v220 = vmul.f32 %v199, %v213
  %v221 = vmul.f32 %v200, %v213
  %v222 = vmul.f32 %v201, %v213
  %v223 = vadd.f32 %v138, %v215
  %v224 = vadd.f32 %v139, %v216
  %v225 = vadd.f32 %v140, %v217
  %v226 = vadd.f32 %v141, %v218
  %v227 = vadd.f32 %v142, %v219
  %v228 = vadd.f32 %v143, %v220
  %v229 = vadd.f32 %v144, %v221
  %v230 = vadd.f32 %v145, %v222
  %231 = vrot.lane.b32.xlu0 %v61, 15
  %v232 = vpop.permute.xlu0 %231
  %233 = vrot.lane.b32.xlu0 %v65, 15
  %v234 = vpop.permute.xlu0 %233
  %235 = vrot.lane.b32.xlu0 %v62, 15
  %v236 = vpop.permute.xlu0 %235
  %237 = vrot.lane.b32.xlu0 %v66, 15
  %v238 = vpop.permute.xlu0 %237
  %239 = vrot.lane.b32.xlu0 %v63, 15
  %v240 = vpop.permute.xlu0 %239
  %241 = vrot.lane.b32.xlu0 %v67, 15
  %v242 = vpop.permute.xlu0 %241
  %243 = vrot.lane.b32.xlu0 %v64, 15
  %v244 = vpop.permute.xlu0 %243
  %245 = vrot.lane.b32.xlu0 %v68, 15
  %v246 = vpop.permute.xlu0 %245
  %vm247 = vcmp.lt.s32.totalorder %v86, 15
  %v248 = vsel %vm247, %v240, %v244
  %v249 = vsel %vm247, %v242, %v246
  %v250 = vsel %vm247, %v236, %v240
  %v251 = vsel %vm247, %v238, %v242
  %v252 = vsel %vm247, %v232, %v236
  %v253 = vsel %vm247, %v234, %v238
  %v254 = vsel %vm247, %v244, %v232
  %v255 = vsel %vm247, %v246, %v234
  %s256 = scalar_lea.vmem %s1, 8
  %v257 = vld [vmem:[%s256] sm:$0xf]
  %v259 = vlaneseq
  %v260 = vshrl.u32 %v259, 7
  %v261 = vsub.s32 0, %v260
  %v262 = vrot.slane %v257, %v261
  %v263 = vlaneseq
  %v264 = vshrl.u32 %v263, 7
  %v265 = vsub.s32 1, %v264
  %v266 = vrot.slane %v257, %v265
  %v267 = vlaneseq
  %v268 = vshrl.u32 %v267, 7
  %v269 = vsub.s32 2, %v268
  %v270 = vrot.slane %v257, %v269
  %v271 = vlaneseq
  %v272 = vshrl.u32 %v271, 7
  %v273 = vsub.s32 3, %v272
  %v274 = vrot.slane %v257, %v273
  %v279 = vmul.f32 %v254, %v262
  %v280 = vmul.f32 %v252, %v266
  %v281 = vmul.f32 %v250, %v270
  %v282 = vmul.f32 %v248, %v274
  %v283 = vmul.f32 %v255, %v262
  %v284 = vmul.f32 %v253, %v266
  %v285 = vmul.f32 %v251, %v270
  %v286 = vmul.f32 %v249, %v274
  %s287 = scalar_lea.vmem %s2, 32
  %v288 = vld [vmem:[%s287] sm:$0xff]
  %v289 = vld [vmem:[%s287 + $0x8] sm:$0xf]
  %291 = vset.pattern.permute.xlu0 0
  %292 = vperm.xlu0 %291, %v288
  %v293 = vpop.permute.xlu0 %292
  %296 = vset.pattern.permute.xlu0 0
  %297 = vperm.xlu0 %296, %v289
  %v298 = vpop.permute.xlu0 %297
  %v300 = vmul.f32 %v279, %v293
  %v301 = vmul.f32 %v280, %v293
  %v302 = vmul.f32 %v281, %v293
  %v303 = vmul.f32 %v282, %v293
  %v304 = vmul.f32 %v283, %v298
  %v305 = vmul.f32 %v284, %v298
  %v306 = vmul.f32 %v285, %v298
  %v307 = vmul.f32 %v286, %v298
  %v308 = vadd.f32 %v223, %v300
  %v309 = vadd.f32 %v224, %v301
  %v310 = vadd.f32 %v225, %v302
  %v311 = vadd.f32 %v226, %v303
  %v312 = vadd.f32 %v227, %v304
  %v313 = vadd.f32 %v228, %v305
  %v314 = vadd.f32 %v229, %v306
  %v315 = vadd.f32 %v230, %v307
  %316 = vrot.lane.b32.xlu0 %v61, 1
  %v317 = vpop.permute.xlu0 %316
  %318 = vrot.lane.b32.xlu0 %v65, 1
  %v319 = vpop.permute.xlu0 %318
  %320 = vrot.lane.b32.xlu0 %v62, 1
  %v321 = vpop.permute.xlu0 %320
  %322 = vrot.lane.b32.xlu0 %v66, 1
  %v323 = vpop.permute.xlu0 %322
  %324 = vrot.lane.b32.xlu0 %v63, 1
  %v325 = vpop.permute.xlu0 %324
  %326 = vrot.lane.b32.xlu0 %v67, 1
  %v327 = vpop.permute.xlu0 %326
  %328 = vrot.lane.b32.xlu0 %v64, 1
  %v329 = vpop.permute.xlu0 %328
  %330 = vrot.lane.b32.xlu0 %v68, 1
  %v331 = vpop.permute.xlu0 %330
  %vm332 = vcmp.lt.s32.totalorder %v86, 1
  %v333 = vsel %vm332, %v325, %v329
  %v334 = vsel %vm332, %v327, %v331
  %v335 = vsel %vm332, %v321, %v325
  %v336 = vsel %vm332, %v323, %v327
  %v337 = vsel %vm332, %v317, %v321
  %v338 = vsel %vm332, %v319, %v323
  %v339 = vsel %vm332, %v329, %v317
  %v340 = vsel %vm332, %v331, %v319
  %s341 = scalar_lea.vmem %s1, 12
  %v342 = vld [vmem:[%s341] sm:$0xf]
  %v344 = vlaneseq
  %v345 = vshrl.u32 %v344, 7
  %v346 = vsub.s32 0, %v345
  %v347 = vrot.slane %v342, %v346
  %v348 = vlaneseq
  %v349 = vshrl.u32 %v348, 7
  %v350 = vsub.s32 1, %v349
  %v351 = vrot.slane %v342, %v350
  %v352 = vlaneseq
  %v353 = vshrl.u32 %v352, 7
  %v354 = vsub.s32 2, %v353
  %v355 = vrot.slane %v342, %v354
  %v356 = vlaneseq
  %v357 = vshrl.u32 %v356, 7
  %v358 = vsub.s32 3, %v357
  %v359 = vrot.slane %v342, %v358
  %v364 = vmul.f32 %v339, %v347
  %v365 = vmul.f32 %v337, %v351
  %v366 = vmul.f32 %v335, %v355
  %v367 = vmul.f32 %v333, %v359
  %v368 = vmul.f32 %v340, %v347
  %v369 = vmul.f32 %v338, %v351
  %v370 = vmul.f32 %v336, %v355
  %v371 = vmul.f32 %v334, %v359
  %s372 = scalar_lea.vmem %s2, 48
  %v373 = vld [vmem:[%s372] sm:$0xff]
  %v374 = vld [vmem:[%s372 + $0x8] sm:$0xf]
  %376 = vset.pattern.permute.xlu0 0
  %377 = vperm.xlu0 %376, %v373
  %v378 = vpop.permute.xlu0 %377
  %381 = vset.pattern.permute.xlu0 0
  %382 = vperm.xlu0 %381, %v374
  %v383 = vpop.permute.xlu0 %382
  %v385 = vmul.f32 %v364, %v378
  %v386 = vmul.f32 %v365, %v378
  %v387 = vmul.f32 %v366, %v378
  %v388 = vmul.f32 %v367, %v378
  %v389 = vmul.f32 %v368, %v383
  %v390 = vmul.f32 %v369, %v383
  %v391 = vmul.f32 %v370, %v383
  %v392 = vmul.f32 %v371, %v383
  %v393 = vadd.f32 %v308, %v385
  %v394 = vadd.f32 %v309, %v386
  %v395 = vadd.f32 %v310, %v387
  %v396 = vadd.f32 %v311, %v388
  %v397 = vadd.f32 %v312, %v389
  %v398 = vadd.f32 %v313, %v390
  %v399 = vadd.f32 %v314, %v391
  %v400 = vadd.f32 %v315, %v392
  %s401 = scalar_lea.vmem %s2, 64
  %v402 = vld [vmem:[%s401] sm:$0xff]
  %v403 = vld [vmem:[%s401 + $0x8] sm:$0xf]
  %405 = vset.pattern.permute.xlu0 0
  %406 = vperm.xlu0 %405, %v402
  %v407 = vpop.permute.xlu0 %406
  %410 = vset.pattern.permute.xlu0 0
  %411 = vperm.xlu0 %410, %v403
  %v412 = vpop.permute.xlu0 %411
  %v414 = vmul.f32 %v61, %v407
  %v415 = vmul.f32 %v62, %v407
  %v416 = vmul.f32 %v63, %v407
  %v417 = vmul.f32 %v64, %v407
  %v418 = vmul.f32 %v65, %v412
  %v419 = vmul.f32 %v66, %v412
  %v420 = vmul.f32 %v67, %v412
  %v421 = vmul.f32 %v68, %v412
  %v422 = vadd.f32 %v393, %v414
  %v423 = vadd.f32 %v394, %v415
  %v424 = vadd.f32 %v395, %v416
  %v425 = vadd.f32 %v396, %v417
  %v426 = vadd.f32 %v397, %v418
  %v427 = vadd.f32 %v398, %v419
  %v428 = vadd.f32 %v399, %v420
  %v429 = vadd.f32 %v400, %v421
  %430 = vrot.lane.b32.xlu0 %v61, 127
  %v431 = vpop.permute.xlu0 %430
  %432 = vrot.lane.b32.xlu0 %v65, 127
  %v433 = vpop.permute.xlu0 %432
  %434 = vrot.lane.b32.xlu0 %v62, 127
  %v435 = vpop.permute.xlu0 %434
  %436 = vrot.lane.b32.xlu0 %v66, 127
  %v437 = vpop.permute.xlu0 %436
  %438 = vrot.lane.b32.xlu0 %v63, 127
  %v439 = vpop.permute.xlu0 %438
  %440 = vrot.lane.b32.xlu0 %v67, 127
  %v441 = vpop.permute.xlu0 %440
  %442 = vrot.lane.b32.xlu0 %v64, 127
  %v443 = vpop.permute.xlu0 %442
  %444 = vrot.lane.b32.xlu0 %v68, 127
  %v445 = vpop.permute.xlu0 %444
  %vm446 = vcmp.lt.s32.totalorder %v86, 127
  %v447 = vsel %vm446, %v439, %v443
  %v448 = vsel %vm446, %v441, %v445
  %v449 = vsel %vm446, %v435, %v439
  %v450 = vsel %vm446, %v437, %v441
  %v451 = vsel %vm446, %v431, %v435
  %v452 = vsel %vm446, %v433, %v437
  %v453 = vsel %vm446, %v443, %v431
  %v454 = vsel %vm446, %v445, %v433
  %s455 = scalar_lea.vmem %s1, 20
  %v456 = vld [vmem:[%s455] sm:$0xf]
  %v458 = vlaneseq
  %v459 = vshrl.u32 %v458, 7
  %v460 = vsub.s32 0, %v459
  %v461 = vrot.slane %v456, %v460
  %v462 = vlaneseq
  %v463 = vshrl.u32 %v462, 7
  %v464 = vsub.s32 1, %v463
  %v465 = vrot.slane %v456, %v464
  %v466 = vlaneseq
  %v467 = vshrl.u32 %v466, 7
  %v468 = vsub.s32 2, %v467
  %v469 = vrot.slane %v456, %v468
  %v470 = vlaneseq
  %v471 = vshrl.u32 %v470, 7
  %v472 = vsub.s32 3, %v471
  %v473 = vrot.slane %v456, %v472
  %v478 = vmul.f32 %v451, %v461
  %v479 = vmul.f32 %v449, %v465
  %v480 = vmul.f32 %v447, %v469
  %v481 = vmul.f32 %v453, %v473
  %v482 = vmul.f32 %v452, %v461
  %v483 = vmul.f32 %v450, %v465
  %v484 = vmul.f32 %v448, %v469
  %v485 = vmul.f32 %v454, %v473
  %s486 = scalar_lea.vmem %s2, 80
  %v487 = vld [vmem:[%s486] sm:$0xff]
  %v488 = vld [vmem:[%s486 + $0x8] sm:$0xf]
  %490 = vset.pattern.permute.xlu0 0
  %491 = vperm.xlu0 %490, %v487
  %v492 = vpop.permute.xlu0 %491
  %495 = vset.pattern.permute.xlu0 0
  %496 = vperm.xlu0 %495, %v488
  %v497 = vpop.permute.xlu0 %496
  %v499 = vmul.f32 %v478, %v492
  %v500 = vmul.f32 %v479, %v492
  %v501 = vmul.f32 %v480, %v492
  %v502 = vmul.f32 %v481, %v492
  %v503 = vmul.f32 %v482, %v497
  %v504 = vmul.f32 %v483, %v497
  %v505 = vmul.f32 %v484, %v497
  %v506 = vmul.f32 %v485, %v497
  %v507 = vadd.f32 %v422, %v499
  %v508 = vadd.f32 %v423, %v500
  %v509 = vadd.f32 %v424, %v501
  %v510 = vadd.f32 %v425, %v502
  %v511 = vadd.f32 %v426, %v503
  %v512 = vadd.f32 %v427, %v504
  %v513 = vadd.f32 %v428, %v505
  %v514 = vadd.f32 %v429, %v506
  %515 = vrot.lane.b32.xlu0 %v61, 113
  %v516 = vpop.permute.xlu0 %515
  %517 = vrot.lane.b32.xlu0 %v65, 113
  %v518 = vpop.permute.xlu0 %517
  %519 = vrot.lane.b32.xlu0 %v62, 113
  %v520 = vpop.permute.xlu0 %519
  %521 = vrot.lane.b32.xlu0 %v66, 113
  %v522 = vpop.permute.xlu0 %521
  %523 = vrot.lane.b32.xlu0 %v63, 113
  %v524 = vpop.permute.xlu0 %523
  %525 = vrot.lane.b32.xlu0 %v67, 113
  %v526 = vpop.permute.xlu0 %525
  %527 = vrot.lane.b32.xlu0 %v64, 113
  %v528 = vpop.permute.xlu0 %527
  %529 = vrot.lane.b32.xlu0 %v68, 113
  %v530 = vpop.permute.xlu0 %529
  %vm531 = vcmp.lt.s32.totalorder %v86, 113
  %v532 = vsel %vm531, %v524, %v528
  %v533 = vsel %vm531, %v526, %v530
  %v534 = vsel %vm531, %v520, %v524
  %v535 = vsel %vm531, %v522, %v526
  %v536 = vsel %vm531, %v516, %v520
  %v537 = vsel %vm531, %v518, %v522
  %v538 = vsel %vm531, %v528, %v516
  %v539 = vsel %vm531, %v530, %v518
  %s540 = scalar_lea.vmem %s1, 24
  %v541 = vld [vmem:[%s540] sm:$0xf]
  %v543 = vlaneseq
  %v544 = vshrl.u32 %v543, 7
  %v545 = vsub.s32 0, %v544
  %v546 = vrot.slane %v541, %v545
  %v547 = vlaneseq
  %v548 = vshrl.u32 %v547, 7
  %v549 = vsub.s32 1, %v548
  %v550 = vrot.slane %v541, %v549
  %v551 = vlaneseq
  %v552 = vshrl.u32 %v551, 7
  %v553 = vsub.s32 2, %v552
  %v554 = vrot.slane %v541, %v553
  %v555 = vlaneseq
  %v556 = vshrl.u32 %v555, 7
  %v557 = vsub.s32 3, %v556
  %v558 = vrot.slane %v541, %v557
  %v563 = vmul.f32 %v536, %v546
  %v564 = vmul.f32 %v534, %v550
  %v565 = vmul.f32 %v532, %v554
  %v566 = vmul.f32 %v538, %v558
  %v567 = vmul.f32 %v537, %v546
  %v568 = vmul.f32 %v535, %v550
  %v569 = vmul.f32 %v533, %v554
  %v570 = vmul.f32 %v539, %v558
  %s571 = scalar_lea.vmem %s2, 96
  %v572 = vld [vmem:[%s571] sm:$0xff]
  %v573 = vld [vmem:[%s571 + $0x8] sm:$0xf]
  %575 = vset.pattern.permute.xlu0 0
  %576 = vperm.xlu0 %575, %v572
  %v577 = vpop.permute.xlu0 %576
  %580 = vset.pattern.permute.xlu0 0
  %581 = vperm.xlu0 %580, %v573
  %v582 = vpop.permute.xlu0 %581
  %v584 = vmul.f32 %v563, %v577
  %v585 = vmul.f32 %v564, %v577
  %v586 = vmul.f32 %v565, %v577
  %v587 = vmul.f32 %v566, %v577
  %v588 = vmul.f32 %v567, %v582
  %v589 = vmul.f32 %v568, %v582
  %v590 = vmul.f32 %v569, %v582
  %v591 = vmul.f32 %v570, %v582
  %v592 = vadd.f32 %v507, %v584
  %v593 = vadd.f32 %v508, %v585
  %v594 = vadd.f32 %v509, %v586
  %v595 = vadd.f32 %v510, %v587
  %v596 = vadd.f32 %v511, %v588
  %v597 = vadd.f32 %v512, %v589
  %v598 = vadd.f32 %v513, %v590
  %v599 = vadd.f32 %v514, %v591
  %600 = vrot.lane.b32.xlu0 %v61, 112
  %v601 = vpop.permute.xlu0 %600
  %602 = vrot.lane.b32.xlu0 %v65, 112
  %v603 = vpop.permute.xlu0 %602
  %604 = vrot.lane.b32.xlu0 %v62, 112
  %v605 = vpop.permute.xlu0 %604
  %606 = vrot.lane.b32.xlu0 %v66, 112
  %v607 = vpop.permute.xlu0 %606
  %608 = vrot.lane.b32.xlu0 %v63, 112
  %v609 = vpop.permute.xlu0 %608
  %610 = vrot.lane.b32.xlu0 %v67, 112
  %v611 = vpop.permute.xlu0 %610
  %612 = vrot.lane.b32.xlu0 %v64, 112
  %v613 = vpop.permute.xlu0 %612
  %614 = vrot.lane.b32.xlu0 %v68, 112
  %v615 = vpop.permute.xlu0 %614
  %vm616 = vcmp.lt.s32.totalorder %v86, 112
  %v617 = vsel %vm616, %v609, %v613
  %v618 = vsel %vm616, %v611, %v615
  %v619 = vsel %vm616, %v605, %v609
  %v620 = vsel %vm616, %v607, %v611
  %v621 = vsel %vm616, %v601, %v605
  %v622 = vsel %vm616, %v603, %v607
  %v623 = vsel %vm616, %v613, %v601
  %v624 = vsel %vm616, %v615, %v603
  %s625 = scalar_lea.vmem %s1, 28
  %v626 = vld [vmem:[%s625] sm:$0xf]
  %v628 = vlaneseq
  %v629 = vshrl.u32 %v628, 7
  %v630 = vsub.s32 0, %v629
  %v631 = vrot.slane %v626, %v630
  %v632 = vlaneseq
  %v633 = vshrl.u32 %v632, 7
  %v634 = vsub.s32 1, %v633
  %v635 = vrot.slane %v626, %v634
  %v636 = vlaneseq
  %v637 = vshrl.u32 %v636, 7
  %v638 = vsub.s32 2, %v637
  %v639 = vrot.slane %v626, %v638
  %v640 = vlaneseq
  %v641 = vshrl.u32 %v640, 7
  %v642 = vsub.s32 3, %v641
  %v643 = vrot.slane %v626, %v642
  %v648 = vmul.f32 %v621, %v631
  %v649 = vmul.f32 %v619, %v635
  %v650 = vmul.f32 %v617, %v639
  %v651 = vmul.f32 %v623, %v643
  %v652 = vmul.f32 %v622, %v631
  %v653 = vmul.f32 %v620, %v635
  %v654 = vmul.f32 %v618, %v639
  %v655 = vmul.f32 %v624, %v643
  %s656 = scalar_lea.vmem %s2, 112
  %v657 = vld [vmem:[%s656] sm:$0xff]
  %v658 = vld [vmem:[%s656 + $0x8] sm:$0xf]
  %660 = vset.pattern.permute.xlu0 0
  %661 = vperm.xlu0 %660, %v657
  %v662 = vpop.permute.xlu0 %661
  %665 = vset.pattern.permute.xlu0 0
  %666 = vperm.xlu0 %665, %v658
  %v667 = vpop.permute.xlu0 %666
  %v669 = vmul.f32 %v648, %v662
  %v670 = vmul.f32 %v649, %v662
  %v671 = vmul.f32 %v650, %v662
  %v672 = vmul.f32 %v651, %v662
  %v673 = vmul.f32 %v652, %v667
  %v674 = vmul.f32 %v653, %v667
  %v675 = vmul.f32 %v654, %v667
  %v676 = vmul.f32 %v655, %v667
  %v677 = vadd.f32 %v592, %v669
  %v678 = vadd.f32 %v593, %v670
  %v679 = vadd.f32 %v594, %v671
  %v680 = vadd.f32 %v595, %v672
  %v681 = vadd.f32 %v596, %v673
  %v682 = vadd.f32 %v597, %v674
  %v683 = vadd.f32 %v598, %v675
  %v684 = vadd.f32 %v599, %v676
  %685 = vrot.lane.b32.xlu0 %v61, 111
  %v686 = vpop.permute.xlu0 %685
  %687 = vrot.lane.b32.xlu0 %v65, 111
  %v688 = vpop.permute.xlu0 %687
  %689 = vrot.lane.b32.xlu0 %v62, 111
  %v690 = vpop.permute.xlu0 %689
  %691 = vrot.lane.b32.xlu0 %v66, 111
  %v692 = vpop.permute.xlu0 %691
  %693 = vrot.lane.b32.xlu0 %v63, 111
  %v694 = vpop.permute.xlu0 %693
  %695 = vrot.lane.b32.xlu0 %v67, 111
  %v696 = vpop.permute.xlu0 %695
  %697 = vrot.lane.b32.xlu0 %v64, 111
  %v698 = vpop.permute.xlu0 %697
  %699 = vrot.lane.b32.xlu0 %v68, 111
  %v700 = vpop.permute.xlu0 %699
  %vm701 = vcmp.lt.s32.totalorder %v86, 111
  %v702 = vsel %vm701, %v694, %v698
  %v703 = vsel %vm701, %v696, %v700
  %v704 = vsel %vm701, %v690, %v694
  %v705 = vsel %vm701, %v692, %v696
  %v706 = vsel %vm701, %v686, %v690
  %v707 = vsel %vm701, %v688, %v692
  %v708 = vsel %vm701, %v698, %v686
  %v709 = vsel %vm701, %v700, %v688
  %s710 = scalar_lea.vmem %s1, 32
  %v711 = vld [vmem:[%s710] sm:$0xf]
  %v713 = vlaneseq
  %v714 = vshrl.u32 %v713, 7
  %v715 = vsub.s32 0, %v714
  %v716 = vrot.slane %v711, %v715
  %v717 = vlaneseq
  %v718 = vshrl.u32 %v717, 7
  %v719 = vsub.s32 1, %v718
  %v720 = vrot.slane %v711, %v719
  %v721 = vlaneseq
  %v722 = vshrl.u32 %v721, 7
  %v723 = vsub.s32 2, %v722
  %v724 = vrot.slane %v711, %v723
  %v725 = vlaneseq
  %v726 = vshrl.u32 %v725, 7
  %v727 = vsub.s32 3, %v726
  %v728 = vrot.slane %v711, %v727
  %v733 = vmul.f32 %v706, %v716
  %v734 = vmul.f32 %v704, %v720
  %v735 = vmul.f32 %v702, %v724
  %v736 = vmul.f32 %v708, %v728
  %v737 = vmul.f32 %v707, %v716
  %v738 = vmul.f32 %v705, %v720
  %v739 = vmul.f32 %v703, %v724
  %v740 = vmul.f32 %v709, %v728
  %s741 = scalar_lea.vmem %s2, 128
  %v742 = vld [vmem:[%s741] sm:$0xff]
  %v743 = vld [vmem:[%s741 + $0x8] sm:$0xf]
  %745 = vset.pattern.permute.xlu0 0
  %746 = vperm.xlu0 %745, %v742
  %v747 = vpop.permute.xlu0 %746
  %750 = vset.pattern.permute.xlu0 0
  %751 = vperm.xlu0 %750, %v743
  %v752 = vpop.permute.xlu0 %751
  %v754 = vmul.f32 %v733, %v747
  %v755 = vmul.f32 %v734, %v747
  %v756 = vmul.f32 %v735, %v747
  %v757 = vmul.f32 %v736, %v747
  %v758 = vmul.f32 %v737, %v752
  %v759 = vmul.f32 %v738, %v752
  %v760 = vmul.f32 %v739, %v752
  %v761 = vmul.f32 %v740, %v752
  %v762 = vadd.f32 %v677, %v754
  %v763 = vadd.f32 %v678, %v755
  %v764 = vadd.f32 %v679, %v756
  %v765 = vadd.f32 %v680, %v757
  %v766 = vadd.f32 %v681, %v758
  %v767 = vadd.f32 %v682, %v759
  %v768 = vadd.f32 %v683, %v760
  %v769 = vadd.f32 %v684, %v761
  %v770 = vld [vmem:[%s3] sm:$0xff]
  %v771 = vld [vmem:[%s3 + $0x8] sm:$0xf]
  %v772 = vld [vmem:[%s4] sm:$0xff]
  %v773 = vld [vmem:[%s4 + $0x8] sm:$0xf]
  %v774 = vadd.f32 %v762, %v763
  %v775 = vadd.f32 %v774, %v764
  %v776 = vadd.f32 %v775, %v765
  %777 = vadd.xlane.f32.xlu0 %v776
  %v778 = vpop.xlane.xlu0 %777
  %vm779 = vcmask 1043456
  %v780 = vsel %vm779, %v766, 0.0
  %v781 = vsel %vm779, %v767, 0.0
  %v782 = vadd.f32 %v780, %v781
  %v783 = vsel %vm779, %v768, 0.0
  %v784 = vadd.f32 %v782, %v783
  %v785 = vsel %vm779, %v769, 0.0
  %v786 = vadd.f32 %v784, %v785
  %787 = vadd.xlane.f32.xlu0 %v786
  %v788 = vpop.xlane.xlu0 %787
  %v789 = vrcp.pop 512.0
  %v790 = vmul.f32 %v778, %v789
  %v791 = vmul.f32 %v788, %v789
  %v792 = vsub.f32 %v762, %v790
  %v793 = vsub.f32 %v763, %v790
  %v794 = vsub.f32 %v764, %v790
  %v795 = vsub.f32 %v765, %v790
  %v796 = vsub.f32 %v766, %v791
  %v797 = vsub.f32 %v767, %v791
  %v798 = vsub.f32 %v768, %v791
  %v799 = vsub.f32 %v769, %v791
  %v800 = vmul.f32 %v792, %v792
  %v801 = vmul.f32 %v793, %v793
  %v802 = vmul.f32 %v794, %v794
  %v803 = vmul.f32 %v795, %v795
  %v804 = vmul.f32 %v796, %v796
  %v805 = vmul.f32 %v797, %v797
  %v806 = vmul.f32 %v798, %v798
  %v807 = vmul.f32 %v799, %v799
  %v808 = vadd.f32 %v800, %v801
  %v809 = vadd.f32 %v808, %v802
  %v810 = vadd.f32 %v809, %v803
  %811 = vadd.xlane.f32.xlu0 %v810
  %v812 = vpop.xlane.xlu0 %811
  %v813 = vsel %vm779, %v804, 0.0
  %v814 = vsel %vm779, %v805, 0.0
  %v815 = vadd.f32 %v813, %v814
  %v816 = vsel %vm779, %v806, 0.0
  %v817 = vadd.f32 %v815, %v816
  %v818 = vsel %vm779, %v807, 0.0
  %v819 = vadd.f32 %v817, %v818
  %820 = vadd.xlane.f32.xlu0 %v819
  %v821 = vpop.xlane.xlu0 %820
  %v822 = vmul.f32 %v812, %v789
  %v823 = vmul.f32 %v821, %v789
  %v824 = vadd.f32 %v822, 1e-05
  %v825 = vadd.f32 %v823, 1e-05
  %v826 = vrsqrt.pop %v824
  %v827 = vrsqrt.pop %v825
  %v828 = vmul.f32 %v770, %v826
  %v829 = vmul.f32 %v771, %v827
  %831 = vset.pattern.permute.xlu0 0
  %832 = vperm.xlu0 %831, %v828
  %v833 = vpop.permute.xlu0 %832
  %836 = vset.pattern.permute.xlu0 0
  %837 = vperm.xlu0 %836, %v829
  %v838 = vpop.permute.xlu0 %837
  %v840 = vmul.f32 %v762, %v833
  %v841 = vmul.f32 %v763, %v833
  %v842 = vmul.f32 %v764, %v833
  %v843 = vmul.f32 %v765, %v833
  %v844 = vmul.f32 %v766, %v838
  %v845 = vmul.f32 %v767, %v838
  %v846 = vmul.f32 %v768, %v838
  %v847 = vmul.f32 %v769, %v838
  %v848 = vmul.f32 %v790, %v828
  %v849 = vmul.f32 %v791, %v829
  %v850 = vsub.f32 %v772, %v848
  %v851 = vsub.f32 %v773, %v849
  %853 = vset.pattern.permute.xlu0 0
  %854 = vperm.xlu0 %853, %v850
  %v855 = vpop.permute.xlu0 %854
  %858 = vset.pattern.permute.xlu0 0
  %859 = vperm.xlu0 %858, %v851
  %v860 = vpop.permute.xlu0 %859
  %v862 = vadd.f32 %v840, %v855
  %v863 = vadd.f32 %v841, %v855
  %v864 = vadd.f32 %v842, %v855
  %v865 = vadd.f32 %v843, %v855
  %v866 = vadd.f32 %v844, %v860
  %v867 = vadd.f32 %v845, %v860
  %v868 = vadd.f32 %v846, %v860
  %v869 = vadd.f32 %v847, %v860
  %v870 = vld [vmem:[%s5] sm:$0xf]
  %v871 = vld [vmem:[%s5 + $0x4] sm:$0xf]
  %v872 = vld [vmem:[%s5 + $0x8] sm:$0xf]
  %v873 = vpack.c.bf16 %v866, %v862
  %v874 = vpack.c.bf16 %v867, %v863
  %v875 = vpack.c.bf16 %v868, %v864
  %v876 = vpack.c.bf16 %v869, %v865
  %v880 = vunpack.c.l.b16 %v870
  %v881 = vunpack.c.l.b16 %v871
  %v882 = vunpack.c.l.b16 %v872
  %v883 = vpack.c.b16 %v881, %v880
  %v884 = vpack.c.b16 %v882, %v882
  %vm885 = vcmask 97280
  %v887 = vsel %vm885, %v883, 0
  %v890 = vsel %vm885, %v884, 0
  %vm892 = vcmask 1045504
  %v894 = vsel %vm892, %v873, 0
  %v897 = vsel %vm892, %v874, 0
  %v900 = vsel %vm892, %v875, 0
  %v903 = vsel %vm892, %v876, 0
  %905 = vmatprep.subr.bf16.mxu0 %v897
  %906 = vmatpush1.bf16.msra.mxu0 %v894
  %907 = vmatprep.subr.bf16.mxu0 0
  %908 = vmatpush1.bf16.msra.mxu0 0
  %909 = vmatprep.subr.bf16.mxu0 0
  %910 = vmatpush1.bf16.msra.mxu0 0
  %911 = vmatprep.subr.bf16.mxu0 0
  %912 = vmatpush1.bf16.msra.mxu0 0
  %913 = vmatprep.subr.bf16.mxu0 0
  %914 = vmatpush1.bf16.msra.mxu0 0
  %915 = vmatprep.subr.bf16.mxu0 0
  %916 = vmatpush1.bf16.msra.mxu0 0
  %917 = vmatprep.subr.bf16.mxu0 0
  %918 = vmatpush1.bf16.msra.mxu0 0
  %919 = vmatprep.subr.bf16.mxu0 0
  %920 = vmatpush1.bf16.msra.mxu0 0
  %921 = vmatprep.subr.bf16.mxu0 0
  %922 = vmatpush1.bf16.msra.mxu0 0
  %923 = vmatprep.subr.bf16.mxu0 0
  %924 = vmatpush1.bf16.msra.mxu0 0
  %925 = vmatprep.subr.bf16.mxu0 0
  %926 = vmatpush1.bf16.msra.mxu0 0
  %927 = vmatprep.subr.bf16.mxu0 0
  %928 = vmatpush1.bf16.msra.mxu0 0
  %929 = vmatprep.subr.bf16.mxu0 0
  %930 = vmatpush1.bf16.msra.mxu0 0
  %931 = vmatprep.subr.bf16.mxu0 0
  %932 = vmatpush1.bf16.msra.mxu0 0
  %933 = vmatprep.subr.bf16.mxu0 0
  %934 = vmatpush1.bf16.msra.mxu0 0
  %935 = vmatprep.subr.bf16.mxu0 0
  %936 = vmatpush1.bf16.msra.mxu0 0
  %937 = vmatprep.mubr.bf16.mxu0 0
  %938 = vmatmul.mubr.bf16.gmra.mrb[0].mxu0 %v887
  %v939 = vpop.f32.mrb[0].mxu0
  %v940 = vadd.f32 0.0, %v939
  %v941 = vpop.f32.mrb[0].mxu0
  %v942 = vadd.f32 0.0, %v941
  %v943 = vpop.f32.mrb[0].mxu0
  %v944 = vadd.f32 0.0, %v943
  %v945 = vpop.f32.mrb[0].mxu0
  %v946 = vadd.f32 0.0, %v945
  %947 = vmatprep.mubr.bf16.mxu0 0
  %948 = vmatmul.mubr.bf16.gmra.mrb[0].mxu0 %v890
  %v949 = vpop.f32.mrb[0].mxu0
  %v950 = vadd.f32 0.0, %v949
  %v951 = vpop.f32.mrb[0].mxu0
  %v952 = vadd.f32 0.0, %v951
  %v953 = vpop.f32.mrb[0].mxu0
  %v954 = vpop.f32.mrb[0].mxu0
  %955 = vdwg.mxu0
  %956 = vmatprep.subr.bf16.mxu0 %v903
  %957 = vmatpush1.bf16.msra.mxu0 %v900
  %958 = vmatprep.subr.bf16.mxu0 0
  %959 = vmatpush1.bf16.msra.mxu0 0
  %960 = vmatprep.subr.bf16.mxu0 0
  %961 = vmatpush1.bf16.msra.mxu0 0
  %962 = vmatprep.subr.bf16.mxu0 0
  %963 = vmatpush1.bf16.msra.mxu0 0
  %964 = vmatprep.subr.bf16.mxu0 0
  %965 = vmatpush1.bf16.msra.mxu0 0
  %966 = vmatprep.subr.bf16.mxu0 0
  %967 = vmatpush1.bf16.msra.mxu0 0
  %968 = vmatprep.subr.bf16.mxu0 0
  %969 = vmatpush1.bf16.msra.mxu0 0
  %970 = vmatprep.subr.bf16.mxu0 0
  %971 = vmatpush1.bf16.msra.mxu0 0
  %972 = vmatprep.subr.bf16.mxu0 0
  %973 = vmatpush1.bf16.msra.mxu0 0
  %974 = vmatprep.subr.bf16.mxu0 0
  %975 = vmatpush1.bf16.msra.mxu0 0
  %976 = vmatprep.subr.bf16.mxu0 0
  %977 = vmatpush1.bf16.msra.mxu0 0
  %978 = vmatprep.subr.bf16.mxu0 0
  %979 = vmatpush1.bf16.msra.mxu0 0
  %980 = vmatprep.subr.bf16.mxu0 0
  %981 = vmatpush1.bf16.msra.mxu0 0
  %982 = vmatprep.subr.bf16.mxu0 0
  %983 = vmatpush1.bf16.msra.mxu0 0
  %984 = vmatprep.subr.bf16.mxu0 0
  %985 = vmatpush1.bf16.msra.mxu0 0
  %986 = vmatprep.subr.bf16.mxu0 0
  %987 = vmatpush1.bf16.msra.mxu0 0
  %988 = vmatprep.mubr.bf16.mxu0 0
  %989 = vmatmul.mubr.bf16.gmra.mrb[0].mxu0 %v887
  %v990 = vpop.f32.mrb[0].mxu0
  %v991 = vadd.f32 0.0, %v990
  %v992 = vpop.f32.mrb[0].mxu0
  %v993 = vadd.f32 0.0, %v992
  %v994 = vpop.f32.mrb[0].mxu0
  %v995 = vadd.f32 0.0, %v994
  %v996 = vpop.f32.mrb[0].mxu0
  %v997 = vadd.f32 0.0, %v996
  %998 = vmatprep.mubr.bf16.mxu0 0
  %999 = vmatmul.mubr.bf16.gmra.mrb[0].mxu0 %v890
  %v1000 = vpop.f32.mrb[0].mxu0
  %v1001 = vadd.f32 0.0, %v1000
  %v1002 = vpop.f32.mrb[0].mxu0
  %v1003 = vadd.f32 0.0, %v1002
  %v1004 = vpop.f32.mrb[0].mxu0
  %v1005 = vpop.f32.mrb[0].mxu0
  %1006 = vdwg.mxu0
  %v1007 = vld [vmem:[%s6] sm:$0xff]
  %v1008 = vld [vmem:[%s6 + $0x8] sm:$0xff]
  %v1009 = vld [vmem:[%s6 + $0x10] sm:$0xff]
  %v1010 = vld [vmem:[%s7] sm:$0xff]
  %v1011 = vld [vmem:[%s7 + $0x8] sm:$0xff]
  %v1012 = vld [vmem:[%s7 + $0x10] sm:$0xff]
  %v1013 = vadd.f32 %v940, %v942
  %v1014 = vadd.f32 %v1013, %v991
  %v1015 = vadd.f32 %v1014, %v993
  %1016 = vadd.xlane.f32.xlu0 %v1015
  %v1017 = vpop.xlane.xlu0 %1016
  %v1018 = vadd.f32 %v944, %v946
  %v1019 = vadd.f32 %v1018, %v995
  %v1020 = vadd.f32 %v1019, %v997
  %1021 = vadd.xlane.f32.xlu0 %v1020
  %v1022 = vpop.xlane.xlu0 %1021
  %v1023 = vadd.f32 %v950, %v952
  %v1024 = vadd.f32 %v1023, %v1001
  %v1025 = vadd.f32 %v1024, %v1003
  %1026 = vadd.xlane.f32.xlu0 %v1025
  %v1027 = vpop.xlane.xlu0 %1026
  %v1028 = vmul.f32 %v1017, %v789
  %v1029 = vmul.f32 %v1022, %v789
  %v1030 = vmul.f32 %v1027, %v789
  %v1031 = vsub.f32 %v940, %v1028
  %v1032 = vsub.f32 %v942, %v1028
  %v1033 = vsub.f32 %v991, %v1028
  %v1034 = vsub.f32 %v993, %v1028
  %v1035 = vsub.f32 %v944, %v1029
  %v1036 = vsub.f32 %v946, %v1029
  %v1037 = vsub.f32 %v995, %v1029
  %v1038 = vsub.f32 %v997, %v1029
  %v1039 = vsub.f32 %v950, %v1030
  %v1040 = vsub.f32 %v952, %v1030
  %v1041 = vsub.f32 %v1001, %v1030
  %v1042 = vsub.f32 %v1003, %v1030
  %v1043 = vmul.f32 %v1031, %v1031
  %v1044 = vmul.f32 %v1032, %v1032
  %v1045 = vmul.f32 %v1033, %v1033
  %v1046 = vmul.f32 %v1034, %v1034
  %v1047 = vmul.f32 %v1035, %v1035
  %v1048 = vmul.f32 %v1036, %v1036
  %v1049 = vmul.f32 %v1037, %v1037
  %v1050 = vmul.f32 %v1038, %v1038
  %v1051 = vmul.f32 %v1039, %v1039
  %v1052 = vmul.f32 %v1040, %v1040
  %v1053 = vmul.f32 %v1041, %v1041
  %v1054 = vmul.f32 %v1042, %v1042
  %v1055 = vadd.f32 %v1043, %v1044
  %v1056 = vadd.f32 %v1055, %v1045
  %v1057 = vadd.f32 %v1056, %v1046
  %1058 = vadd.xlane.f32.xlu0 %v1057
  %v1059 = vpop.xlane.xlu0 %1058
  %v1060 = vadd.f32 %v1047, %v1048
  %v1061 = vadd.f32 %v1060, %v1049
  %v1062 = vadd.f32 %v1061, %v1050
  %1063 = vadd.xlane.f32.xlu0 %v1062
  %v1064 = vpop.xlane.xlu0 %1063
  %v1065 = vadd.f32 %v1051, %v1052
  %v1066 = vadd.f32 %v1065, %v1053
  %v1067 = vadd.f32 %v1066, %v1054
  %1068 = vadd.xlane.f32.xlu0 %v1067
  %v1069 = vpop.xlane.xlu0 %1068
  %v1070 = vmul.f32 %v1059, %v789
  %v1071 = vmul.f32 %v1064, %v789
  %v1072 = vmul.f32 %v1069, %v789
  %v1073 = vadd.f32 %v1070, 1e-05
  %v1074 = vadd.f32 %v1071, 1e-05
  %v1075 = vadd.f32 %v1072, 1e-05
  %v1076 = vrsqrt.pop %v1073
  %v1077 = vrsqrt.pop %v1074
  %v1078 = vrsqrt.pop %v1075
  %v1079 = vmul.f32 %v1007, %v1076
  %v1080 = vmul.f32 %v1008, %v1077
  %v1081 = vmul.f32 %v1009, %v1078
  %1083 = vset.pattern.permute.xlu0 0
  %1084 = vperm.xlu0 %1083, %v1079
  %v1085 = vpop.permute.xlu0 %1084
  %1088 = vset.pattern.permute.xlu0 0
  %1089 = vperm.xlu0 %1088, %v1080
  %v1090 = vpop.permute.xlu0 %1089
  %1093 = vset.pattern.permute.xlu0 0
  %1094 = vperm.xlu0 %1093, %v1081
  %v1095 = vpop.permute.xlu0 %1094
  %v1097 = vmul.f32 %v940, %v1085
  %v1098 = vmul.f32 %v942, %v1085
  %v1099 = vmul.f32 %v991, %v1085
  %v1100 = vmul.f32 %v993, %v1085
  %v1101 = vmul.f32 %v944, %v1090
  %v1102 = vmul.f32 %v946, %v1090
  %v1103 = vmul.f32 %v995, %v1090
  %v1104 = vmul.f32 %v997, %v1090
  %v1105 = vmul.f32 %v950, %v1095
  %v1106 = vmul.f32 %v952, %v1095
  %v1107 = vmul.f32 %v1001, %v1095
  %v1108 = vmul.f32 %v1003, %v1095
  %v1109 = vmul.f32 %v1028, %v1079
  %v1110 = vmul.f32 %v1029, %v1080
  %v1111 = vmul.f32 %v1030, %v1081
  %v1112 = vsub.f32 %v1010, %v1109
  %v1113 = vsub.f32 %v1011, %v1110
  %v1114 = vsub.f32 %v1012, %v1111
  %1116 = vset.pattern.permute.xlu0 0
  %1117 = vperm.xlu0 %1116, %v1112
  %v1118 = vpop.permute.xlu0 %1117
  %1121 = vset.pattern.permute.xlu0 0
  %1122 = vperm.xlu0 %1121, %v1113
  %v1123 = vpop.permute.xlu0 %1122
  %1126 = vset.pattern.permute.xlu0 0
  %1127 = vperm.xlu0 %1126, %v1114
  %v1128 = vpop.permute.xlu0 %1127
  %v1130 = vadd.f32 %v1097, %v1118
  %v1131 = vadd.f32 %v1098, %v1118
  %v1132 = vadd.f32 %v1099, %v1118
  %v1133 = vadd.f32 %v1100, %v1118
  %v1134 = vadd.f32 %v1101, %v1123
  %v1135 = vadd.f32 %v1102, %v1123
  %v1136 = vadd.f32 %v1103, %v1123
  %v1137 = vadd.f32 %v1104, %v1123
  %v1138 = vadd.f32 %v1105, %v1128
  %v1139 = vadd.f32 %v1106, %v1128
  %v1140 = vadd.f32 %v1107, %v1128
  %v1141 = vadd.f32 %v1108, %v1128
  %v1142 = vmax.f32 %v1130, 0.0
  %v1143 = vmax.f32 %v1131, 0.0
  %v1144 = vmax.f32 %v1132, 0.0
  %v1145 = vmax.f32 %v1133, 0.0
  %v1146 = vmax.f32 %v1134, 0.0
  %v1147 = vmax.f32 %v1135, 0.0
  %v1148 = vmax.f32 %v1136, 0.0
  %v1149 = vmax.f32 %v1137, 0.0
  %v1150 = vmax.f32 %v1138, 0.0
  %v1151 = vmax.f32 %v1139, 0.0
  %v1152 = vmax.f32 %v1140, 0.0
  %v1153 = vmax.f32 %v1141, 0.0
  %v1154 = vpack.c.bf16 %v1146, %v1142
  %v1155 = vpack.c.bf16 %v1147, %v1143
  %v1156 = vpack.c.bf16 %v1148, %v1144
  %v1157 = vpack.c.bf16 %v1149, %v1145
  %v1158 = vpack.c.bf16 %v1150, %v1150
  %v1159 = vpack.c.bf16 %v1151, %v1151
  %v1160 = vpack.c.bf16 %v1152, %v1152
  %v1161 = vpack.c.bf16 %v1153, %v1153
  %v1162 = vunpack.c.l.bf16 %v1154
  %v1163 = vunpack.c.l.bf16 %v1155
  %v1164 = vunpack.c.l.bf16 %v1156
  %v1165 = vunpack.c.l.bf16 %v1157
  %v1166 = vunpack.c.h.bf16 %v1154
  %v1167 = vunpack.c.h.bf16 %v1155
  %v1168 = vunpack.c.h.bf16 %v1156
  %v1169 = vunpack.c.h.bf16 %v1157
  %v1170 = vunpack.c.l.bf16 %v1158
  %v1171 = vunpack.c.l.bf16 %v1159
  %v1172 = vunpack.c.l.bf16 %v1160
  %v1173 = vunpack.c.l.bf16 %v1161
  %1174 = vrot.lane.b32.xlu0 %v1162, 17
  %v1175 = vpop.permute.xlu0 %1174
  %1176 = vrot.lane.b32.xlu0 %v1166, 17
  %v1177 = vpop.permute.xlu0 %1176
  %1178 = vrot.lane.b32.xlu0 %v1170, 17
  %v1179 = vpop.permute.xlu0 %1178
  %1180 = vrot.lane.b32.xlu0 %v1163, 17
  %v1181 = vpop.permute.xlu0 %1180
  %1182 = vrot.lane.b32.xlu0 %v1167, 17
  %v1183 = vpop.permute.xlu0 %1182
  %1184 = vrot.lane.b32.xlu0 %v1171, 17
  %v1185 = vpop.permute.xlu0 %1184
  %1186 = vrot.lane.b32.xlu0 %v1164, 17
  %v1187 = vpop.permute.xlu0 %1186
  %1188 = vrot.lane.b32.xlu0 %v1168, 17
  %v1189 = vpop.permute.xlu0 %1188
  %1190 = vrot.lane.b32.xlu0 %v1172, 17
  %v1191 = vpop.permute.xlu0 %1190
  %1192 = vrot.lane.b32.xlu0 %v1165, 17
  %v1193 = vpop.permute.xlu0 %1192
  %1194 = vrot.lane.b32.xlu0 %v1169, 17
  %v1195 = vpop.permute.xlu0 %1194
  %1196 = vrot.lane.b32.xlu0 %v1173, 17
  %v1197 = vpop.permute.xlu0 %1196
  %v1198 = vsel %vm87, %v1187, %v1193
  %v1199 = vsel %vm87, %v1189, %v1195
  %v1200 = vsel %vm87, %v1191, %v1197
  %v1201 = vsel %vm87, %v1181, %v1187
  %v1202 = vsel %vm87, %v1183, %v1189
  %v1203 = vsel %vm87, %v1185, %v1191
  %v1204 = vsel %vm87, %v1175, %v1181
  %v1205 = vsel %vm87, %v1177, %v1183
  %v1206 = vsel %vm87, %v1179, %v1185
  %v1207 = vsel %vm87, %v1193, %v1175
  %v1208 = vsel %vm87, %v1195, %v1177
  %v1209 = vsel %vm87, %v1197, %v1179
  %v1210 = vmul.f32 %v1207, %v101
  %v1211 = vmul.f32 %v1204, %v105
  %v1212 = vmul.f32 %v1201, %v109
  %v1213 = vmul.f32 %v1198, %v113
  %v1214 = vmul.f32 %v1208, %v101
  %v1215 = vmul.f32 %v1205, %v105
  %v1216 = vmul.f32 %v1202, %v109
  %v1217 = vmul.f32 %v1199, %v113
  %v1218 = vmul.f32 %v1209, %v101
  %v1219 = vmul.f32 %v1206, %v105
  %v1220 = vmul.f32 %v1203, %v109
  %v1221 = vmul.f32 %v1200, %v113
  %v1222 = vld [vmem:[%s8] sm:$0xff]
  %v1223 = vld [vmem:[%s8 + $0x8] sm:$0xff]
  %v1224 = vld [vmem:[%s8 + $0x10] sm:$0xff]
  %1226 = vset.pattern.permute.xlu0 0
  %1227 = vperm.xlu0 %1226, %v1222
  %v1228 = vpop.permute.xlu0 %1227
  %1231 = vset.pattern.permute.xlu0 0
  %1232 = vperm.xlu0 %1231, %v1223
  %v1233 = vpop.permute.xlu0 %1232
  %1236 = vset.pattern.permute.xlu0 0
  %1237 = vperm.xlu0 %1236, %v1224
  %v1238 = vpop.permute.xlu0 %1237
  %v1240 = vmul.f32 %v1210, %v1228
  %v1241 = vmul.f32 %v1211, %v1228
  %v1242 = vmul.f32 %v1212, %v1228
  %v1243 = vmul.f32 %v1213, %v1228
  %v1244 = vmul.f32 %v1214, %v1233
  %v1245 = vmul.f32 %v1215, %v1233
  %v1246 = vmul.f32 %v1216, %v1233
  %v1247 = vmul.f32 %v1217, %v1233
  %v1248 = vmul.f32 %v1218, %v1238
  %v1249 = vmul.f32 %v1219, %v1238
  %v1250 = vmul.f32 %v1220, %v1238
  %v1251 = vmul.f32 %v1221, %v1238
  %1252 = vrot.lane.b32.xlu0 %v1162, 16
  %v1253 = vpop.permute.xlu0 %1252
  %1254 = vrot.lane.b32.xlu0 %v1166, 16
  %v1255 = vpop.permute.xlu0 %1254
  %1256 = vrot.lane.b32.xlu0 %v1170, 16
  %v1257 = vpop.permute.xlu0 %1256
  %1258 = vrot.lane.b32.xlu0 %v1163, 16
  %v1259 = vpop.permute.xlu0 %1258
  %1260 = vrot.lane.b32.xlu0 %v1167, 16
  %v1261 = vpop.permute.xlu0 %1260
  %1262 = vrot.lane.b32.xlu0 %v1171, 16
  %v1263 = vpop.permute.xlu0 %1262
  %1264 = vrot.lane.b32.xlu0 %v1164, 16
  %v1265 = vpop.permute.xlu0 %1264
  %1266 = vrot.lane.b32.xlu0 %v1168, 16
  %v1267 = vpop.permute.xlu0 %1266
  %1268 = vrot.lane.b32.xlu0 %v1172, 16
  %v1269 = vpop.permute.xlu0 %1268
  %1270 = vrot.lane.b32.xlu0 %v1165, 16
  %v1271 = vpop.permute.xlu0 %1270
  %1272 = vrot.lane.b32.xlu0 %v1169, 16
  %v1273 = vpop.permute.xlu0 %1272
  %1274 = vrot.lane.b32.xlu0 %v1173, 16
  %v1275 = vpop.permute.xlu0 %1274
  %v1276 = vsel %vm162, %v1265, %v1271
  %v1277 = vsel %vm162, %v1267, %v1273
  %v1278 = vsel %vm162, %v1269, %v1275
  %v1279 = vsel %vm162, %v1259, %v1265
  %v1280 = vsel %vm162, %v1261, %v1267
  %v1281 = vsel %vm162, %v1263, %v1269
  %v1282 = vsel %vm162, %v1253, %v1259
  %v1283 = vsel %vm162, %v1255, %v1261
  %v1284 = vsel %vm162, %v1257, %v1263
  %v1285 = vsel %vm162, %v1271, %v1253
  %v1286 = vsel %vm162, %v1273, %v1255
  %v1287 = vsel %vm162, %v1275, %v1257
  %v1288 = vmul.f32 %v1285, %v177
  %v1289 = vmul.f32 %v1282, %v181
  %v1290 = vmul.f32 %v1279, %v185
  %v1291 = vmul.f32 %v1276, %v189
  %v1292 = vmul.f32 %v1286, %v177
  %v1293 = vmul.f32 %v1283, %v181
  %v1294 = vmul.f32 %v1280, %v185
  %v1295 = vmul.f32 %v1277, %v189
  %v1296 = vmul.f32 %v1287, %v177
  %v1297 = vmul.f32 %v1284, %v181
  %v1298 = vmul.f32 %v1281, %v185
  %v1299 = vmul.f32 %v1278, %v189
  %s1300 = scalar_lea.vmem %s8, 24
  %v1301 = vld [vmem:[%s1300] sm:$0xff]
  %v1302 = vld [vmem:[%s1300 + $0x8] sm:$0xff]
  %v1303 = vld [vmem:[%s1300 + $0x10] sm:$0xff]
  %1305 = vset.pattern.permute.xlu0 0
  %1306 = vperm.xlu0 %1305, %v1301
  %v1307 = vpop.permute.xlu0 %1306
  %1310 = vset.pattern.permute.xlu0 0
  %1311 = vperm.xlu0 %1310, %v1302
  %v1312 = vpop.permute.xlu0 %1311
  %1315 = vset.pattern.permute.xlu0 0
  %1316 = vperm.xlu0 %1315, %v1303
  %v1317 = vpop.permute.xlu0 %1316
  %v1319 = vmul.f32 %v1288, %v1307
  %v1320 = vmul.f32 %v1289, %v1307
  %v1321 = vmul.f32 %v1290, %v1307
  %v1322 = vmul.f32 %v1291, %v1307
  %v1323 = vmul.f32 %v1292, %v1312
  %v1324 = vmul.f32 %v1293, %v1312
  %v1325 = vmul.f32 %v1294, %v1312
  %v1326 = vmul.f32 %v1295, %v1312
  %v1327 = vmul.f32 %v1296, %v1317
  %v1328 = vmul.f32 %v1297, %v1317
  %v1329 = vmul.f32 %v1298, %v1317
  %v1330 = vmul.f32 %v1299, %v1317
  %v1331 = vadd.f32 %v1240, %v1319
  %v1332 = vadd.f32 %v1241, %v1320
  %v1333 = vadd.f32 %v1242, %v1321
  %v1334 = vadd.f32 %v1243, %v1322
  %v1335 = vadd.f32 %v1244, %v1323
  %v1336 = vadd.f32 %v1245, %v1324
  %v1337 = vadd.f32 %v1246, %v1325
  %v1338 = vadd.f32 %v1247, %v1326
  %v1339 = vadd.f32 %v1248, %v1327
  %v1340 = vadd.f32 %v1249, %v1328
  %v1341 = vadd.f32 %v1250, %v1329
  %v1342 = vadd.f32 %v1251, %v1330
  %1343 = vrot.lane.b32.xlu0 %v1162, 15
  %v1344 = vpop.permute.xlu0 %1343
  %1345 = vrot.lane.b32.xlu0 %v1166, 15
  %v1346 = vpop.permute.xlu0 %1345
  %1347 = vrot.lane.b32.xlu0 %v1170, 15
  %v1348 = vpop.permute.xlu0 %1347
  %1349 = vrot.lane.b32.xlu0 %v1163, 15
  %v1350 = vpop.permute.xlu0 %1349
  %1351 = vrot.lane.b32.xlu0 %v1167, 15
  %v1352 = vpop.permute.xlu0 %1351
  %1353 = vrot.lane.b32.xlu0 %v1171, 15
  %v1354 = vpop.permute.xlu0 %1353
  %1355 = vrot.lane.b32.xlu0 %v1164, 15
  %v1356 = vpop.permute.xlu0 %1355
  %1357 = vrot.lane.b32.xlu0 %v1168, 15
  %v1358 = vpop.permute.xlu0 %1357
  %1359 = vrot.lane.b32.xlu0 %v1172, 15
  %v1360 = vpop.permute.xlu0 %1359
  %1361 = vrot.lane.b32.xlu0 %v1165, 15
  %v1362 = vpop.permute.xlu0 %1361
  %1363 = vrot.lane.b32.xlu0 %v1169, 15
  %v1364 = vpop.permute.xlu0 %1363
  %1365 = vrot.lane.b32.xlu0 %v1173, 15
  %v1366 = vpop.permute.xlu0 %1365
  %v1367 = vsel %vm247, %v1356, %v1362
  %v1368 = vsel %vm247, %v1358, %v1364
  %v1369 = vsel %vm247, %v1360, %v1366
  %v1370 = vsel %vm247, %v1350, %v1356
  %v1371 = vsel %vm247, %v1352, %v1358
  %v1372 = vsel %vm247, %v1354, %v1360
  %v1373 = vsel %vm247, %v1344, %v1350
  %v1374 = vsel %vm247, %v1346, %v1352
  %v1375 = vsel %vm247, %v1348, %v1354
  %v1376 = vsel %vm247, %v1362, %v1344
  %v1377 = vsel %vm247, %v1364, %v1346
  %v1378 = vsel %vm247, %v1366, %v1348
  %v1379 = vmul.f32 %v1376, %v262
  %v1380 = vmul.f32 %v1373, %v266
  %v1381 = vmul.f32 %v1370, %v270
  %v1382 = vmul.f32 %v1367, %v274
  %v1383 = vmul.f32 %v1377, %v262
  %v1384 = vmul.f32 %v1374, %v266
  %v1385 = vmul.f32 %v1371, %v270
  %v1386 = vmul.f32 %v1368, %v274
  %v1387 = vmul.f32 %v1378, %v262
  %v1388 = vmul.f32 %v1375, %v266
  %v1389 = vmul.f32 %v1372, %v270
  %v1390 = vmul.f32 %v1369, %v274
  %s1391 = scalar_lea.vmem %s8, 48
  %v1392 = vld [vmem:[%s1391] sm:$0xff]
  %v1393 = vld [vmem:[%s1391 + $0x8] sm:$0xff]
  %v1394 = vld [vmem:[%s1391 + $0x10] sm:$0xff]
  %1396 = vset.pattern.permute.xlu0 0
  %1397 = vperm.xlu0 %1396, %v1392
  %v1398 = vpop.permute.xlu0 %1397
  %1401 = vset.pattern.permute.xlu0 0
  %1402 = vperm.xlu0 %1401, %v1393
  %v1403 = vpop.permute.xlu0 %1402
  %1406 = vset.pattern.permute.xlu0 0
  %1407 = vperm.xlu0 %1406, %v1394
  %v1408 = vpop.permute.xlu0 %1407
  %v1410 = vmul.f32 %v1379, %v1398
  %v1411 = vmul.f32 %v1380, %v1398
  %v1412 = vmul.f32 %v1381, %v1398
  %v1413 = vmul.f32 %v1382, %v1398
  %v1414 = vmul.f32 %v1383, %v1403
  %v1415 = vmul.f32 %v1384, %v1403
  %v1416 = vmul.f32 %v1385, %v1403
  %v1417 = vmul.f32 %v1386, %v1403
  %v1418 = vmul.f32 %v1387, %v1408
  %v1419 = vmul.f32 %v1388, %v1408
  %v1420 = vmul.f32 %v1389, %v1408
  %v1421 = vmul.f32 %v1390, %v1408
  %v1422 = vadd.f32 %v1331, %v1410
  %v1423 = vadd.f32 %v1332, %v1411
  %v1424 = vadd.f32 %v1333, %v1412
  %v1425 = vadd.f32 %v1334, %v1413
  %v1426 = vadd.f32 %v1335, %v1414
  %v1427 = vadd.f32 %v1336, %v1415
  %v1428 = vadd.f32 %v1337, %v1416
  %v1429 = vadd.f32 %v1338, %v1417
  %v1430 = vadd.f32 %v1339, %v1418
  %v1431 = vadd.f32 %v1340, %v1419
  %v1432 = vadd.f32 %v1341, %v1420
  %v1433 = vadd.f32 %v1342, %v1421
  %1434 = vrot.lane.b32.xlu0 %v1162, 1
  %v1435 = vpop.permute.xlu0 %1434
  %1436 = vrot.lane.b32.xlu0 %v1166, 1
  %v1437 = vpop.permute.xlu0 %1436
  %1438 = vrot.lane.b32.xlu0 %v1170, 1
  %v1439 = vpop.permute.xlu0 %1438
  %1440 = vrot.lane.b32.xlu0 %v1163, 1
  %v1441 = vpop.permute.xlu0 %1440
  %1442 = vrot.lane.b32.xlu0 %v1167, 1
  %v1443 = vpop.permute.xlu0 %1442
  %1444 = vrot.lane.b32.xlu0 %v1171, 1
  %v1445 = vpop.permute.xlu0 %1444
  %1446 = vrot.lane.b32.xlu0 %v1164, 1
  %v1447 = vpop.permute.xlu0 %1446
  %1448 = vrot.lane.b32.xlu0 %v1168, 1
  %v1449 = vpop.permute.xlu0 %1448
  %1450 = vrot.lane.b32.xlu0 %v1172, 1
  %v1451 = vpop.permute.xlu0 %1450
  %1452 = vrot.lane.b32.xlu0 %v1165, 1
  %v1453 = vpop.permute.xlu0 %1452
  %1454 = vrot.lane.b32.xlu0 %v1169, 1
  %v1455 = vpop.permute.xlu0 %1454
  %1456 = vrot.lane.b32.xlu0 %v1173, 1
  %v1457 = vpop.permute.xlu0 %1456
  %v1458 = vsel %vm332, %v1447, %v1453
  %v1459 = vsel %vm332, %v1449, %v1455
  %v1460 = vsel %vm332, %v1451, %v1457
  %v1461 = vsel %vm332, %v1441, %v1447
  %v1462 = vsel %vm332, %v1443, %v1449
  %v1463 = vsel %vm332, %v1445, %v1451
  %v1464 = vsel %vm332, %v1435, %v1441
  %v1465 = vsel %vm332, %v1437, %v1443
  %v1466 = vsel %vm332, %v1439, %v1445
  %v1467 = vsel %vm332, %v1453, %v1435
  %v1468 = vsel %vm332, %v1455, %v1437
  %v1469 = vsel %vm332, %v1457, %v1439
  %v1470 = vmul.f32 %v1467, %v347
  %v1471 = vmul.f32 %v1464, %v351
  %v1472 = vmul.f32 %v1461, %v355
  %v1473 = vmul.f32 %v1458, %v359
  %v1474 = vmul.f32 %v1468, %v347
  %v1475 = vmul.f32 %v1465, %v351
  %v1476 = vmul.f32 %v1462, %v355
  %v1477 = vmul.f32 %v1459, %v359
  %v1478 = vmul.f32 %v1469, %v347
  %v1479 = vmul.f32 %v1466, %v351
  %v1480 = vmul.f32 %v1463, %v355
  %v1481 = vmul.f32 %v1460, %v359
  %s1482 = scalar_lea.vmem %s8, 72
  %v1483 = vld [vmem:[%s1482] sm:$0xff]
  %v1484 = vld [vmem:[%s1482 + $0x8] sm:$0xff]
  %v1485 = vld [vmem:[%s1482 + $0x10] sm:$0xff]
  %1487 = vset.pattern.permute.xlu0 0
  %1488 = vperm.xlu0 %1487, %v1483
  %v1489 = vpop.permute.xlu0 %1488
  %1492 = vset.pattern.permute.xlu0 0
  %1493 = vperm.xlu0 %1492, %v1484
  %v1494 = vpop.permute.xlu0 %1493
  %1497 = vset.pattern.permute.xlu0 0
  %1498 = vperm.xlu0 %1497, %v1485
  %v1499 = vpop.permute.xlu0 %1498
  %v1501 = vmul.f32 %v1470, %v1489
  %v1502 = vmul.f32 %v1471, %v1489
  %v1503 = vmul.f32 %v1472, %v1489
  %v1504 = vmul.f32 %v1473, %v1489
  %v1505 = vmul.f32 %v1474, %v1494
  %v1506 = vmul.f32 %v1475, %v1494
  %v1507 = vmul.f32 %v1476, %v1494
  %v1508 = vmul.f32 %v1477, %v1494
  %v1509 = vmul.f32 %v1478, %v1499
  %v1510 = vmul.f32 %v1479, %v1499
  %v1511 = vmul.f32 %v1480, %v1499
  %v1512 = vmul.f32 %v1481, %v1499
  %v1513 = vadd.f32 %v1422, %v1501
  %v1514 = vadd.f32 %v1423, %v1502
  %v1515 = vadd.f32 %v1424, %v1503
  %v1516 = vadd.f32 %v1425, %v1504
  %v1517 = vadd.f32 %v1426, %v1505
  %v1518 = vadd.f32 %v1427, %v1506
  %v1519 = vadd.f32 %v1428, %v1507
  %v1520 = vadd.f32 %v1429, %v1508
  %v1521 = vadd.f32 %v1430, %v1509
  %v1522 = vadd.f32 %v1431, %v1510
  %v1523 = vadd.f32 %v1432, %v1511
  %v1524 = vadd.f32 %v1433, %v1512
  %s1525 = scalar_lea.vmem %s8, 96
  %v1526 = vld [vmem:[%s1525] sm:$0xff]
  %v1527 = vld [vmem:[%s1525 + $0x8] sm:$0xff]
  %v1528 = vld [vmem:[%s1525 + $0x10] sm:$0xff]
  %1530 = vset.pattern.permute.xlu0 0
  %1531 = vperm.xlu0 %1530, %v1526
  %v1532 = vpop.permute.xlu0 %1531
  %1535 = vset.pattern.permute.xlu0 0
  %1536 = vperm.xlu0 %1535, %v1527
  %v1537 = vpop.permute.xlu0 %1536
  %1540 = vset.pattern.permute.xlu0 0
  %1541 = vperm.xlu0 %1540, %v1528
  %v1542 = vpop.permute.xlu0 %1541
  %v1544 = vmul.f32 %v1162, %v1532
  %v1545 = vmul.f32 %v1163, %v1532
  %v1546 = vmul.f32 %v1164, %v1532
  %v1547 = vmul.f32 %v1165, %v1532
  %v1548 = vmul.f32 %v1166, %v1537
  %v1549 = vmul.f32 %v1167, %v1537
  %v1550 = vmul.f32 %v1168, %v1537
  %v1551 = vmul.f32 %v1169, %v1537
  %v1552 = vmul.f32 %v1170, %v1542
  %v1553 = vmul.f32 %v1171, %v1542
  %v1554 = vmul.f32 %v1172, %v1542
  %v1555 = vmul.f32 %v1173, %v1542
  %v1556 = vadd.f32 %v1513, %v1544
  %v1557 = vadd.f32 %v1514, %v1545
  %v1558 = vadd.f32 %v1515, %v1546
  %v1559 = vadd.f32 %v1516, %v1547
  %v1560 = vadd.f32 %v1517, %v1548
  %v1561 = vadd.f32 %v1518, %v1549
  %v1562 = vadd.f32 %v1519, %v1550
  %v1563 = vadd.f32 %v1520, %v1551
  %v1564 = vadd.f32 %v1521, %v1552
  %v1565 = vadd.f32 %v1522, %v1553
  %v1566 = vadd.f32 %v1523, %v1554
  %v1567 = vadd.f32 %v1524, %v1555
  %1568 = vrot.lane.b32.xlu0 %v1162, 127
  %v1569 = vpop.permute.xlu0 %1568
  %1570 = vrot.lane.b32.xlu0 %v1166, 127
  %v1571 = vpop.permute.xlu0 %1570
  %1572 = vrot.lane.b32.xlu0 %v1170, 127
  %v1573 = vpop.permute.xlu0 %1572
  %1574 = vrot.lane.b32.xlu0 %v1163, 127
  %v1575 = vpop.permute.xlu0 %1574
  %1576 = vrot.lane.b32.xlu0 %v1167, 127
  %v1577 = vpop.permute.xlu0 %1576
  %1578 = vrot.lane.b32.xlu0 %v1171, 127
  %v1579 = vpop.permute.xlu0 %1578
  %1580 = vrot.lane.b32.xlu0 %v1164, 127
  %v1581 = vpop.permute.xlu0 %1580
  %1582 = vrot.lane.b32.xlu0 %v1168, 127
  %v1583 = vpop.permute.xlu0 %1582
  %1584 = vrot.lane.b32.xlu0 %v1172, 127
  %v1585 = vpop.permute.xlu0 %1584
  %1586 = vrot.lane.b32.xlu0 %v1165, 127
  %v1587 = vpop.permute.xlu0 %1586
  %1588 = vrot.lane.b32.xlu0 %v1169, 127
  %v1589 = vpop.permute.xlu0 %1588
  %1590 = vrot.lane.b32.xlu0 %v1173, 127
  %v1591 = vpop.permute.xlu0 %1590
  %v1592 = vsel %vm446, %v1581, %v1587
  %v1593 = vsel %vm446, %v1583, %v1589
  %v1594 = vsel %vm446, %v1585, %v1591
  %v1595 = vsel %vm446, %v1575, %v1581
  %v1596 = vsel %vm446, %v1577, %v1583
  %v1597 = vsel %vm446, %v1579, %v1585
  %v1598 = vsel %vm446, %v1569, %v1575
  %v1599 = vsel %vm446, %v1571, %v1577
  %v1600 = vsel %vm446, %v1573, %v1579
  %v1601 = vsel %vm446, %v1587, %v1569
  %v1602 = vsel %vm446, %v1589, %v1571
  %v1603 = vsel %vm446, %v1591, %v1573
  %v1604 = vmul.f32 %v1598, %v461
  %v1605 = vmul.f32 %v1595, %v465
  %v1606 = vmul.f32 %v1592, %v469
  %v1607 = vmul.f32 %v1601, %v473
  %v1608 = vmul.f32 %v1599, %v461
  %v1609 = vmul.f32 %v1596, %v465
  %v1610 = vmul.f32 %v1593, %v469
  %v1611 = vmul.f32 %v1602, %v473
  %v1612 = vmul.f32 %v1600, %v461
  %v1613 = vmul.f32 %v1597, %v465
  %v1614 = vmul.f32 %v1594, %v469
  %v1615 = vmul.f32 %v1603, %v473
  %s1616 = scalar_lea.vmem %s8, 120
  %v1617 = vld [vmem:[%s1616] sm:$0xff]
  %v1618 = vld [vmem:[%s1616 + $0x8] sm:$0xff]
  %v1619 = vld [vmem:[%s1616 + $0x10] sm:$0xff]
  %1621 = vset.pattern.permute.xlu0 0
  %1622 = vperm.xlu0 %1621, %v1617
  %v1623 = vpop.permute.xlu0 %1622
  %1626 = vset.pattern.permute.xlu0 0
  %1627 = vperm.xlu0 %1626, %v1618
  %v1628 = vpop.permute.xlu0 %1627
  %1631 = vset.pattern.permute.xlu0 0
  %1632 = vperm.xlu0 %1631, %v1619
  %v1633 = vpop.permute.xlu0 %1632
  %v1635 = vmul.f32 %v1604, %v1623
  %v1636 = vmul.f32 %v1605, %v1623
  %v1637 = vmul.f32 %v1606, %v1623
  %v1638 = vmul.f32 %v1607, %v1623
  %v1639 = vmul.f32 %v1608, %v1628
  %v1640 = vmul.f32 %v1609, %v1628
  %v1641 = vmul.f32 %v1610, %v1628
  %v1642 = vmul.f32 %v1611, %v1628
  %v1643 = vmul.f32 %v1612, %v1633
  %v1644 = vmul.f32 %v1613, %v1633
  %v1645 = vmul.f32 %v1614, %v1633
  %v1646 = vmul.f32 %v1615, %v1633
  %v1647 = vadd.f32 %v1556, %v1635
  %v1648 = vadd.f32 %v1557, %v1636
  %v1649 = vadd.f32 %v1558, %v1637
  %v1650 = vadd.f32 %v1559, %v1638
  %v1651 = vadd.f32 %v1560, %v1639
  %v1652 = vadd.f32 %v1561, %v1640
  %v1653 = vadd.f32 %v1562, %v1641
  %v1654 = vadd.f32 %v1563, %v1642
  %v1655 = vadd.f32 %v1564, %v1643
  %v1656 = vadd.f32 %v1565, %v1644
  %v1657 = vadd.f32 %v1566, %v1645
  %v1658 = vadd.f32 %v1567, %v1646
  %1659 = vrot.lane.b32.xlu0 %v1162, 113
  %v1660 = vpop.permute.xlu0 %1659
  %1661 = vrot.lane.b32.xlu0 %v1166, 113
  %v1662 = vpop.permute.xlu0 %1661
  %1663 = vrot.lane.b32.xlu0 %v1170, 113
  %v1664 = vpop.permute.xlu0 %1663
  %1665 = vrot.lane.b32.xlu0 %v1163, 113
  %v1666 = vpop.permute.xlu0 %1665
  %1667 = vrot.lane.b32.xlu0 %v1167, 113
  %v1668 = vpop.permute.xlu0 %1667
  %1669 = vrot.lane.b32.xlu0 %v1171, 113
  %v1670 = vpop.permute.xlu0 %1669
  %1671 = vrot.lane.b32.xlu0 %v1164, 113
  %v1672 = vpop.permute.xlu0 %1671
  %1673 = vrot.lane.b32.xlu0 %v1168, 113
  %v1674 = vpop.permute.xlu0 %1673
  %1675 = vrot.lane.b32.xlu0 %v1172, 113
  %v1676 = vpop.permute.xlu0 %1675
  %1677 = vrot.lane.b32.xlu0 %v1165, 113
  %v1678 = vpop.permute.xlu0 %1677
  %1679 = vrot.lane.b32.xlu0 %v1169, 113
  %v1680 = vpop.permute.xlu0 %1679
  %1681 = vrot.lane.b32.xlu0 %v1173, 113
  %v1682 = vpop.permute.xlu0 %1681
  %v1683 = vsel %vm531, %v1672, %v1678
  %v1684 = vsel %vm531, %v1674, %v1680
  %v1685 = vsel %vm531, %v1676, %v1682
  %v1686 = vsel %vm531, %v1666, %v1672
  %v1687 = vsel %vm531, %v1668, %v1674
  %v1688 = vsel %vm531, %v1670, %v1676
  %v1689 = vsel %vm531, %v1660, %v1666
  %v1690 = vsel %vm531, %v1662, %v1668
  %v1691 = vsel %vm531, %v1664, %v1670
  %v1692 = vsel %vm531, %v1678, %v1660
  %v1693 = vsel %vm531, %v1680, %v1662
  %v1694 = vsel %vm531, %v1682, %v1664
  %v1695 = vmul.f32 %v1689, %v546
  %v1696 = vmul.f32 %v1686, %v550
  %v1697 = vmul.f32 %v1683, %v554
  %v1698 = vmul.f32 %v1692, %v558
  %v1699 = vmul.f32 %v1690, %v546
  %v1700 = vmul.f32 %v1687, %v550
  %v1701 = vmul.f32 %v1684, %v554
  %v1702 = vmul.f32 %v1693, %v558
  %v1703 = vmul.f32 %v1691, %v546
  %v1704 = vmul.f32 %v1688, %v550
  %v1705 = vmul.f32 %v1685, %v554
  %v1706 = vmul.f32 %v1694, %v558
  %s1707 = scalar_lea.vmem %s8, 144
  %v1708 = vld [vmem:[%s1707] sm:$0xff]
  %v1709 = vld [vmem:[%s1707 + $0x8] sm:$0xff]
  %v1710 = vld [vmem:[%s1707 + $0x10] sm:$0xff]
  %1712 = vset.pattern.permute.xlu0 0
  %1713 = vperm.xlu0 %1712, %v1708
  %v1714 = vpop.permute.xlu0 %1713
  %1717 = vset.pattern.permute.xlu0 0
  %1718 = vperm.xlu0 %1717, %v1709
  %v1719 = vpop.permute.xlu0 %1718
  %1722 = vset.pattern.permute.xlu0 0
  %1723 = vperm.xlu0 %1722, %v1710
  %v1724 = vpop.permute.xlu0 %1723
  %v1726 = vmul.f32 %v1695, %v1714
  %v1727 = vmul.f32 %v1696, %v1714
  %v1728 = vmul.f32 %v1697, %v1714
  %v1729 = vmul.f32 %v1698, %v1714
  %v1730 = vmul.f32 %v1699, %v1719
  %v1731 = vmul.f32 %v1700, %v1719
  %v1732 = vmul.f32 %v1701, %v1719
  %v1733 = vmul.f32 %v1702, %v1719
  %v1734 = vmul.f32 %v1703, %v1724
  %v1735 = vmul.f32 %v1704, %v1724
  %v1736 = vmul.f32 %v1705, %v1724
  %v1737 = vmul.f32 %v1706, %v1724
  %v1738 = vadd.f32 %v1647, %v1726
  %v1739 = vadd.f32 %v1648, %v1727
  %v1740 = vadd.f32 %v1649, %v1728
  %v1741 = vadd.f32 %v1650, %v1729
  %v1742 = vadd.f32 %v1651, %v1730
  %v1743 = vadd.f32 %v1652, %v1731
  %v1744 = vadd.f32 %v1653, %v1732
  %v1745 = vadd.f32 %v1654, %v1733
  %v1746 = vadd.f32 %v1655, %v1734
  %v1747 = vadd.f32 %v1656, %v1735
  %v1748 = vadd.f32 %v1657, %v1736
  %v1749 = vadd.f32 %v1658, %v1737
  %1750 = vrot.lane.b32.xlu0 %v1162, 112
  %v1751 = vpop.permute.xlu0 %1750
  %1752 = vrot.lane.b32.xlu0 %v1166, 112
  %v1753 = vpop.permute.xlu0 %1752
  %1754 = vrot.lane.b32.xlu0 %v1170, 112
  %v1755 = vpop.permute.xlu0 %1754
  %1756 = vrot.lane.b32.xlu0 %v1163, 112
  %v1757 = vpop.permute.xlu0 %1756
  %1758 = vrot.lane.b32.xlu0 %v1167, 112
  %v1759 = vpop.permute.xlu0 %1758
  %1760 = vrot.lane.b32.xlu0 %v1171, 112
  %v1761 = vpop.permute.xlu0 %1760
  %1762 = vrot.lane.b32.xlu0 %v1164, 112
  %v1763 = vpop.permute.xlu0 %1762
  %1764 = vrot.lane.b32.xlu0 %v1168, 112
  %v1765 = vpop.permute.xlu0 %1764
  %1766 = vrot.lane.b32.xlu0 %v1172, 112
  %v1767 = vpop.permute.xlu0 %1766
  %1768 = vrot.lane.b32.xlu0 %v1165, 112
  %v1769 = vpop.permute.xlu0 %1768
  %1770 = vrot.lane.b32.xlu0 %v1169, 112
  %v1771 = vpop.permute.xlu0 %1770
  %1772 = vrot.lane.b32.xlu0 %v1173, 112
  %v1773 = vpop.permute.xlu0 %1772
  %v1774 = vsel %vm616, %v1763, %v1769
  %v1775 = vsel %vm616, %v1765, %v1771
  %v1776 = vsel %vm616, %v1767, %v1773
  %v1777 = vsel %vm616, %v1757, %v1763
  %v1778 = vsel %vm616, %v1759, %v1765
  %v1779 = vsel %vm616, %v1761, %v1767
  %v1780 = vsel %vm616, %v1751, %v1757
  %v1781 = vsel %vm616, %v1753, %v1759
  %v1782 = vsel %vm616, %v1755, %v1761
  %v1783 = vsel %vm616, %v1769, %v1751
  %v1784 = vsel %vm616, %v1771, %v1753
  %v1785 = vsel %vm616, %v1773, %v1755
  %v1786 = vmul.f32 %v1780, %v631
  %v1787 = vmul.f32 %v1777, %v635
  %v1788 = vmul.f32 %v1774, %v639
  %v1789 = vmul.f32 %v1783, %v643
  %v1790 = vmul.f32 %v1781, %v631
  %v1791 = vmul.f32 %v1778, %v635
  %v1792 = vmul.f32 %v1775, %v639
  %v1793 = vmul.f32 %v1784, %v643
  %v1794 = vmul.f32 %v1782, %v631
  %v1795 = vmul.f32 %v1779, %v635
  %v1796 = vmul.f32 %v1776, %v639
  %v1797 = vmul.f32 %v1785, %v643
  %s1798 = scalar_lea.vmem %s8, 168
  %v1799 = vld [vmem:[%s1798] sm:$0xff]
  %v1800 = vld [vmem:[%s1798 + $0x8] sm:$0xff]
  %v1801 = vld [vmem:[%s1798 + $0x10] sm:$0xff]
  %1803 = vset.pattern.permute.xlu0 0
  %1804 = vperm.xlu0 %1803, %v1799
  %v1805 = vpop.permute.xlu0 %1804
  %1808 = vset.pattern.permute.xlu0 0
  %1809 = vperm.xlu0 %1808, %v1800
  %v1810 = vpop.permute.xlu0 %1809
  %1813 = vset.pattern.permute.xlu0 0
  %1814 = vperm.xlu0 %1813, %v1801
  %v1815 = vpop.permute.xlu0 %1814
  %v1817 = vmul.f32 %v1786, %v1805
  %v1818 = vmul.f32 %v1787, %v1805
  %v1819 = vmul.f32 %v1788, %v1805
  %v1820 = vmul.f32 %v1789, %v1805
  %v1821 = vmul.f32 %v1790, %v1810
  %v1822 = vmul.f32 %v1791, %v1810
  %v1823 = vmul.f32 %v1792, %v1810
  %v1824 = vmul.f32 %v1793, %v1810
  %v1825 = vmul.f32 %v1794, %v1815
  %v1826 = vmul.f32 %v1795, %v1815
  %v1827 = vmul.f32 %v1796, %v1815
  %v1828 = vmul.f32 %v1797, %v1815
  %v1829 = vadd.f32 %v1738, %v1817
  %v1830 = vadd.f32 %v1739, %v1818
  %v1831 = vadd.f32 %v1740, %v1819
  %v1832 = vadd.f32 %v1741, %v1820
  %v1833 = vadd.f32 %v1742, %v1821
  %v1834 = vadd.f32 %v1743, %v1822
  %v1835 = vadd.f32 %v1744, %v1823
  %v1836 = vadd.f32 %v1745, %v1824
  %v1837 = vadd.f32 %v1746, %v1825
  %v1838 = vadd.f32 %v1747, %v1826
  %v1839 = vadd.f32 %v1748, %v1827
  %v1840 = vadd.f32 %v1749, %v1828
  %1841 = vrot.lane.b32.xlu0 %v1162, 111
  %v1842 = vpop.permute.xlu0 %1841
  %1843 = vrot.lane.b32.xlu0 %v1166, 111
  %v1844 = vpop.permute.xlu0 %1843
  %1845 = vrot.lane.b32.xlu0 %v1170, 111
  %v1846 = vpop.permute.xlu0 %1845
  %1847 = vrot.lane.b32.xlu0 %v1163, 111
  %v1848 = vpop.permute.xlu0 %1847
  %1849 = vrot.lane.b32.xlu0 %v1167, 111
  %v1850 = vpop.permute.xlu0 %1849
  %1851 = vrot.lane.b32.xlu0 %v1171, 111
  %v1852 = vpop.permute.xlu0 %1851
  %1853 = vrot.lane.b32.xlu0 %v1164, 111
  %v1854 = vpop.permute.xlu0 %1853
  %1855 = vrot.lane.b32.xlu0 %v1168, 111
  %v1856 = vpop.permute.xlu0 %1855
  %1857 = vrot.lane.b32.xlu0 %v1172, 111
  %v1858 = vpop.permute.xlu0 %1857
  %1859 = vrot.lane.b32.xlu0 %v1165, 111
  %v1860 = vpop.permute.xlu0 %1859
  %1861 = vrot.lane.b32.xlu0 %v1169, 111
  %v1862 = vpop.permute.xlu0 %1861
  %1863 = vrot.lane.b32.xlu0 %v1173, 111
  %v1864 = vpop.permute.xlu0 %1863
  %v1865 = vsel %vm701, %v1854, %v1860
  %v1866 = vsel %vm701, %v1856, %v1862
  %v1867 = vsel %vm701, %v1858, %v1864
  %v1868 = vsel %vm701, %v1848, %v1854
  %v1869 = vsel %vm701, %v1850, %v1856
  %v1870 = vsel %vm701, %v1852, %v1858
  %v1871 = vsel %vm701, %v1842, %v1848
  %v1872 = vsel %vm701, %v1844, %v1850
  %v1873 = vsel %vm701, %v1846, %v1852
  %v1874 = vsel %vm701, %v1860, %v1842
  %v1875 = vsel %vm701, %v1862, %v1844
  %v1876 = vsel %vm701, %v1864, %v1846
  %v1877 = vmul.f32 %v1871, %v716
  %v1878 = vmul.f32 %v1868, %v720
  %v1879 = vmul.f32 %v1865, %v724
  %v1880 = vmul.f32 %v1874, %v728
  %v1881 = vmul.f32 %v1872, %v716
  %v1882 = vmul.f32 %v1869, %v720
  %v1883 = vmul.f32 %v1866, %v724
  %v1884 = vmul.f32 %v1875, %v728
  %v1885 = vmul.f32 %v1873, %v716
  %v1886 = vmul.f32 %v1870, %v720
  %v1887 = vmul.f32 %v1867, %v724
  %v1888 = vmul.f32 %v1876, %v728
  %s1889 = scalar_lea.vmem %s8, 192
  %v1890 = vld [vmem:[%s1889] sm:$0xff]
  %v1891 = vld [vmem:[%s1889 + $0x8] sm:$0xff]
  %v1892 = vld [vmem:[%s1889 + $0x10] sm:$0xff]
  %1894 = vset.pattern.permute.xlu0 0
  %1895 = vperm.xlu0 %1894, %v1890
  %v1896 = vpop.permute.xlu0 %1895
  %1899 = vset.pattern.permute.xlu0 0
  %1900 = vperm.xlu0 %1899, %v1891
  %v1901 = vpop.permute.xlu0 %1900
  %1904 = vset.pattern.permute.xlu0 0
  %1905 = vperm.xlu0 %1904, %v1892
  %v1906 = vpop.permute.xlu0 %1905
  %v1908 = vmul.f32 %v1877, %v1896
  %v1909 = vmul.f32 %v1878, %v1896
  %v1910 = vmul.f32 %v1879, %v1896
  %v1911 = vmul.f32 %v1880, %v1896
  %v1912 = vmul.f32 %v1881, %v1901
  %v1913 = vmul.f32 %v1882, %v1901
  %v1914 = vmul.f32 %v1883, %v1901
  %v1915 = vmul.f32 %v1884, %v1901
  %v1916 = vmul.f32 %v1885, %v1906
  %v1917 = vmul.f32 %v1886, %v1906
  %v1918 = vmul.f32 %v1887, %v1906
  %v1919 = vmul.f32 %v1888, %v1906
  %v1920 = vadd.f32 %v1829, %v1908
  %v1921 = vadd.f32 %v1830, %v1909
  %v1922 = vadd.f32 %v1831, %v1910
  %v1923 = vadd.f32 %v1832, %v1911
  %v1924 = vadd.f32 %v1833, %v1912
  %v1925 = vadd.f32 %v1834, %v1913
  %v1926 = vadd.f32 %v1835, %v1914
  %v1927 = vadd.f32 %v1836, %v1915
  %v1928 = vadd.f32 %v1837, %v1916
  %v1929 = vadd.f32 %v1838, %v1917
  %v1930 = vadd.f32 %v1839, %v1918
  %v1931 = vadd.f32 %v1840, %v1919
  %v1932 = vld [vmem:[%s9] sm:$0xff]
  %v1933 = vld [vmem:[%s9 + $0x8] sm:$0xff]
  %v1934 = vld [vmem:[%s9 + $0x10] sm:$0xff]
  %v1935 = vld [vmem:[%s10] sm:$0xff]
  %v1936 = vld [vmem:[%s10 + $0x8] sm:$0xff]
  %v1937 = vld [vmem:[%s10 + $0x10] sm:$0xff]
  %v1938 = vadd.f32 %v1920, %v1921
  %v1939 = vadd.f32 %v1938, %v1922
  %v1940 = vadd.f32 %v1939, %v1923
  %1941 = vadd.xlane.f32.xlu0 %v1940
  %v1942 = vpop.xlane.xlu0 %1941
  %v1943 = vadd.f32 %v1924, %v1925
  %v1944 = vadd.f32 %v1943, %v1926
  %v1945 = vadd.f32 %v1944, %v1927
  %1946 = vadd.xlane.f32.xlu0 %v1945
  %v1947 = vpop.xlane.xlu0 %1946
  %v1948 = vadd.f32 %v1928, %v1929
  %v1949 = vadd.f32 %v1948, %v1930
  %v1950 = vadd.f32 %v1949, %v1931
  %1951 = vadd.xlane.f32.xlu0 %v1950
  %v1952 = vpop.xlane.xlu0 %1951
  %v1953 = vmul.f32 %v1942, %v789
  %v1954 = vmul.f32 %v1947, %v789
  %v1955 = vmul.f32 %v1952, %v789
  %v1956 = vsub.f32 %v1920, %v1953
  %v1957 = vsub.f32 %v1921, %v1953
  %v1958 = vsub.f32 %v1922, %v1953
  %v1959 = vsub.f32 %v1923, %v1953
  %v1960 = vsub.f32 %v1924, %v1954
  %v1961 = vsub.f32 %v1925, %v1954
  %v1962 = vsub.f32 %v1926, %v1954
  %v1963 = vsub.f32 %v1927, %v1954
  %v1964 = vsub.f32 %v1928, %v1955
  %v1965 = vsub.f32 %v1929, %v1955
  %v1966 = vsub.f32 %v1930, %v1955
  %v1967 = vsub.f32 %v1931, %v1955
  %v1968 = vmul.f32 %v1956, %v1956
  %v1969 = vmul.f32 %v1957, %v1957
  %v1970 = vmul.f32 %v1958, %v1958
  %v1971 = vmul.f32 %v1959, %v1959
  %v1972 = vmul.f32 %v1960, %v1960
  %v1973 = vmul.f32 %v1961, %v1961
  %v1974 = vmul.f32 %v1962, %v1962
  %v1975 = vmul.f32 %v1963, %v1963
  %v1976 = vmul.f32 %v1964, %v1964
  %v1977 = vmul.f32 %v1965, %v1965
  %v1978 = vmul.f32 %v1966, %v1966
  %v1979 = vmul.f32 %v1967, %v1967
  %v1980 = vadd.f32 %v1968, %v1969
  %v1981 = vadd.f32 %v1980, %v1970
  %v1982 = vadd.f32 %v1981, %v1971
  %1983 = vadd.xlane.f32.xlu0 %v1982
  %v1984 = vpop.xlane.xlu0 %1983
  %v1985 = vadd.f32 %v1972, %v1973
  %v1986 = vadd.f32 %v1985, %v1974
  %v1987 = vadd.f32 %v1986, %v1975
  %1988 = vadd.xlane.f32.xlu0 %v1987
  %v1989 = vpop.xlane.xlu0 %1988
  %v1990 = vadd.f32 %v1976, %v1977
  %v1991 = vadd.f32 %v1990, %v1978
  %v1992 = vadd.f32 %v1991, %v1979
  %1993 = vadd.xlane.f32.xlu0 %v1992
  %v1994 = vpop.xlane.xlu0 %1993
  %v1995 = vmul.f32 %v1984, %v789
  %v1996 = vmul.f32 %v1989, %v789
  %v1997 = vmul.f32 %v1994, %v789
  %v1998 = vadd.f32 %v1995, 1e-05
  %v1999 = vadd.f32 %v1996, 1e-05
  %v2000 = vadd.f32 %v1997, 1e-05
  %v2001 = vrsqrt.pop %v1998
  %v2002 = vrsqrt.pop %v1999
  %v2003 = vrsqrt.pop %v2000
  %v2004 = vmul.f32 %v1932, %v2001
  %v2005 = vmul.f32 %v1933, %v2002
  %v2006 = vmul.f32 %v1934, %v2003
  %2008 = vset.pattern.permute.xlu0 0
  %2009 = vperm.xlu0 %2008, %v2004
  %v2010 = vpop.permute.xlu0 %2009
  %2013 = vset.pattern.permute.xlu0 0
  %2014 = vperm.xlu0 %2013, %v2005
  %v2015 = vpop.permute.xlu0 %2014
  %2018 = vset.pattern.permute.xlu0 0
  %2019 = vperm.xlu0 %2018, %v2006
  %v2020 = vpop.permute.xlu0 %2019
  %v2022 = vmul.f32 %v1920, %v2010
  %v2023 = vmul.f32 %v1921, %v2010
  %v2024 = vmul.f32 %v1922, %v2010
  %v2025 = vmul.f32 %v1923, %v2010
  %v2026 = vmul.f32 %v1924, %v2015
  %v2027 = vmul.f32 %v1925, %v2015
  %v2028 = vmul.f32 %v1926, %v2015
  %v2029 = vmul.f32 %v1927, %v2015
  %v2030 = vmul.f32 %v1928, %v2020
  %v2031 = vmul.f32 %v1929, %v2020
  %v2032 = vmul.f32 %v1930, %v2020
  %v2033 = vmul.f32 %v1931, %v2020
  %v2034 = vmul.f32 %v1953, %v2004
  %v2035 = vmul.f32 %v1954, %v2005
  %v2036 = vmul.f32 %v1955, %v2006
  %v2037 = vsub.f32 %v1935, %v2034
  %v2038 = vsub.f32 %v1936, %v2035
  %v2039 = vsub.f32 %v1937, %v2036
  %2041 = vset.pattern.permute.xlu0 0
  %2042 = vperm.xlu0 %2041, %v2037
  %v2043 = vpop.permute.xlu0 %2042
  %2046 = vset.pattern.permute.xlu0 0
  %2047 = vperm.xlu0 %2046, %v2038
  %v2048 = vpop.permute.xlu0 %2047
  %2051 = vset.pattern.permute.xlu0 0
  %2052 = vperm.xlu0 %2051, %v2039
  %v2053 = vpop.permute.xlu0 %2052
  %v2055 = vadd.f32 %v2022, %v2043
  %v2056 = vadd.f32 %v2023, %v2043
  %v2057 = vadd.f32 %v2024, %v2043
  %v2058 = vadd.f32 %v2025, %v2043
  %v2059 = vadd.f32 %v2026, %v2048
  %v2060 = vadd.f32 %v2027, %v2048
  %v2061 = vadd.f32 %v2028, %v2048
  %v2062 = vadd.f32 %v2029, %v2048
  %v2063 = vadd.f32 %v2030, %v2053
  %v2064 = vadd.f32 %v2031, %v2053
  %v2065 = vadd.f32 %v2032, %v2053
  %v2066 = vadd.f32 %v2033, %v2053
  %v2067 = vld [vmem:[%s11] sm:$0xf]
  %v2068 = vld [vmem:[%s11 + $0x4] sm:$0xf]
  %v2069 = vld [vmem:[%s11 + $0x8] sm:$0xf]
  %v2070 = vpack.c.bf16 %v2059, %v2055
  %v2071 = vpack.c.bf16 %v2060, %v2056
  %v2072 = vpack.c.bf16 %v2061, %v2057
  %v2073 = vpack.c.bf16 %v2062, %v2058
  %v2074 = vpack.c.bf16 %v2063, %v2063
  %v2075 = vpack.c.bf16 %v2064, %v2064
  %v2076 = vpack.c.bf16 %v2065, %v2065
  %v2077 = vpack.c.bf16 %v2066, %v2066
  %v2081 = vunpack.c.l.b16 %v2067
  %v2082 = vunpack.c.l.b16 %v2068
  %v2083 = vunpack.c.l.b16 %v2069
  %v2084 = vpack.c.b16 %v2082, %v2081
  %v2085 = vpack.c.b16 %v2083, %v2083
  %vm2086 = vcmask 195584
  %v2088 = vsel %vm2086, %v2084, 0
  %v2091 = vsel %vm2086, %v2085, 0
  %v2094 = vsel %vm779, %v2074, 0
  %v2097 = vsel %vm779, %v2075, 0
  %v2100 = vsel %vm779, %v2076, 0
  %v2103 = vsel %vm779, %v2077, 0
  %2105 = vmatprep.subr.bf16.mxu0 %v2071
  %2106 = vmatpush1.bf16.msra.mxu0 %v2070
  %2107 = vmatprep.subr.bf16.mxu0 %v2097
  %2108 = vmatpush1.bf16.msra.mxu0 %v2094
  %2109 = vmatprep.subr.bf16.mxu0 0
  %2110 = vmatpush1.bf16.msra.mxu0 0
  %2111 = vmatprep.subr.bf16.mxu0 0
  %2112 = vmatpush1.bf16.msra.mxu0 0
  %2113 = vmatprep.subr.bf16.mxu0 0
  %2114 = vmatpush1.bf16.msra.mxu0 0
  %2115 = vmatprep.subr.bf16.mxu0 0
  %2116 = vmatpush1.bf16.msra.mxu0 0
  %2117 = vmatprep.subr.bf16.mxu0 0
  %2118 = vmatpush1.bf16.msra.mxu0 0
  %2119 = vmatprep.subr.bf16.mxu0 0
  %2120 = vmatpush1.bf16.msra.mxu0 0
  %2121 = vmatprep.subr.bf16.mxu0 0
  %2122 = vmatpush1.bf16.msra.mxu0 0
  %2123 = vmatprep.subr.bf16.mxu0 0
  %2124 = vmatpush1.bf16.msra.mxu0 0
  %2125 = vmatprep.subr.bf16.mxu0 0
  %2126 = vmatpush1.bf16.msra.mxu0 0
  %2127 = vmatprep.subr.bf16.mxu0 0
  %2128 = vmatpush1.bf16.msra.mxu0 0
  %2129 = vmatprep.subr.bf16.mxu0 0
  %2130 = vmatpush1.bf16.msra.mxu0 0
  %2131 = vmatprep.subr.bf16.mxu0 0
  %2132 = vmatpush1.bf16.msra.mxu0 0
  %2133 = vmatprep.subr.bf16.mxu0 0
  %2134 = vmatpush1.bf16.msra.mxu0 0
  %2135 = vmatprep.subr.bf16.mxu0 0
  %2136 = vmatpush1.bf16.msra.mxu0 0
  %2137 = vmatprep.mubr.bf16.mxu0 0
  %2138 = vmatmul.mubr.bf16.gmra.mrb[0].mxu0 %v2088
  %v2139 = vpop.f32.mrb[0].mxu0
  %v2140 = vadd.f32 0.0, %v2139
  %v2141 = vpop.f32.mrb[0].mxu0
  %v2142 = vadd.f32 0.0, %v2141
  %v2143 = vpop.f32.mrb[0].mxu0
  %v2144 = vadd.f32 0.0, %v2143
  %v2145 = vpop.f32.mrb[0].mxu0
  %v2146 = vadd.f32 0.0, %v2145
  %2147 = vmatprep.mubr.bf16.mxu0 0
  %2148 = vmatmul.mubr.bf16.gmra.mrb[0].mxu0 %v2091
  %v2149 = vpop.f32.mrb[0].mxu0
  %v2150 = vadd.f32 0.0, %v2149
  %v2151 = vpop.f32.mrb[0].mxu0
  %v2152 = vadd.f32 0.0, %v2151
  %v2153 = vpop.f32.mrb[0].mxu0
  %v2154 = vpop.f32.mrb[0].mxu0
  %2155 = vdwg.mxu0
  %2156 = vmatprep.subr.bf16.mxu0 %v2073
  %2157 = vmatpush1.bf16.msra.mxu0 %v2072
  %2158 = vmatprep.subr.bf16.mxu0 %v2103
  %2159 = vmatpush1.bf16.msra.mxu0 %v2100
  %2160 = vmatprep.subr.bf16.mxu0 0
  %2161 = vmatpush1.bf16.msra.mxu0 0
  %2162 = vmatprep.subr.bf16.mxu0 0
  %2163 = vmatpush1.bf16.msra.mxu0 0
  %2164 = vmatprep.subr.bf16.mxu0 0
  %2165 = vmatpush1.bf16.msra.mxu0 0
  %2166 = vmatprep.subr.bf16.mxu0 0
  %2167 = vmatpush1.bf16.msra.mxu0 0
  %2168 = vmatprep.subr.bf16.mxu0 0
  %2169 = vmatpush1.bf16.msra.mxu0 0
  %2170 = vmatprep.subr.bf16.mxu0 0
  %2171 = vmatpush1.bf16.msra.mxu0 0
  %2172 = vmatprep.subr.bf16.mxu0 0
  %2173 = vmatpush1.bf16.msra.mxu0 0
  %2174 = vmatprep.subr.bf16.mxu0 0
  %2175 = vmatpush1.bf16.msra.mxu0 0
  %2176 = vmatprep.subr.bf16.mxu0 0
  %2177 = vmatpush1.bf16.msra.mxu0 0
  %2178 = vmatprep.subr.bf16.mxu0 0
  %2179 = vmatpush1.bf16.msra.mxu0 0
  %2180 = vmatprep.subr.bf16.mxu0 0
  %2181 = vmatpush1.bf16.msra.mxu0 0
  %2182 = vmatprep.subr.bf16.mxu0 0
  %2183 = vmatpush1.bf16.msra.mxu0 0
  %2184 = vmatprep.subr.bf16.mxu0 0
  %2185 = vmatpush1.bf16.msra.mxu0 0
  %2186 = vmatprep.subr.bf16.mxu0 0
  %2187 = vmatpush1.bf16.msra.mxu0 0
  %2188 = vmatprep.mubr.bf16.mxu0 0
  %2189 = vmatmul.mubr.bf16.gmra.mrb[0].mxu0 %v2088
  %v2190 = vpop.f32.mrb[0].mxu0
  %v2191 = vadd.f32 0.0, %v2190
  %v2192 = vpop.f32.mrb[0].mxu0
  %v2193 = vadd.f32 0.0, %v2192
  %v2194 = vpop.f32.mrb[0].mxu0
  %v2195 = vadd.f32 0.0, %v2194
  %v2196 = vpop.f32.mrb[0].mxu0
  %v2197 = vadd.f32 0.0, %v2196
  %2198 = vmatprep.mubr.bf16.mxu0 0
  %2199 = vmatmul.mubr.bf16.gmra.mrb[0].mxu0 %v2091
  %v2200 = vpop.f32.mrb[0].mxu0
  %v2201 = vadd.f32 0.0, %v2200
  %v2202 = vpop.f32.mrb[0].mxu0
  %v2203 = vadd.f32 0.0, %v2202
  %v2204 = vpop.f32.mrb[0].mxu0
  %v2205 = vpop.f32.mrb[0].mxu0
  %2206 = vdwg.mxu0
  %v2207 = vld [vmem:[%s12] sm:$0xff]
  %v2208 = vld [vmem:[%s12 + $0x8] sm:$0xff]
  %v2209 = vld [vmem:[%s12 + $0x10] sm:$0xff]
  %v2210 = vld [vmem:[%s13] sm:$0xff]
  %v2211 = vld [vmem:[%s13 + $0x8] sm:$0xff]
  %v2212 = vld [vmem:[%s13 + $0x10] sm:$0xff]
  %v2213 = vadd.f32 %v2140, %v2142
  %v2214 = vadd.f32 %v2213, %v2191
  %v2215 = vadd.f32 %v2214, %v2193
  %2216 = vadd.xlane.f32.xlu0 %v2215
  %v2217 = vpop.xlane.xlu0 %2216
  %v2218 = vadd.f32 %v2144, %v2146
  %v2219 = vadd.f32 %v2218, %v2195
  %v2220 = vadd.f32 %v2219, %v2197
  %2221 = vadd.xlane.f32.xlu0 %v2220
  %v2222 = vpop.xlane.xlu0 %2221
  %v2223 = vadd.f32 %v2150, %v2152
  %v2224 = vadd.f32 %v2223, %v2201
  %v2225 = vadd.f32 %v2224, %v2203
  %2226 = vadd.xlane.f32.xlu0 %v2225
  %v2227 = vpop.xlane.xlu0 %2226
  %v2228 = vmul.f32 %v2217, %v789
  %v2229 = vmul.f32 %v2222, %v789
  %v2230 = vmul.f32 %v2227, %v789
  %v2231 = vsub.f32 %v2140, %v2228
  %v2232 = vsub.f32 %v2142, %v2228
  %v2233 = vsub.f32 %v2191, %v2228
  %v2234 = vsub.f32 %v2193, %v2228
  %v2235 = vsub.f32 %v2144, %v2229
  %v2236 = vsub.f32 %v2146, %v2229
  %v2237 = vsub.f32 %v2195, %v2229
  %v2238 = vsub.f32 %v2197, %v2229
  %v2239 = vsub.f32 %v2150, %v2230
  %v2240 = vsub.f32 %v2152, %v2230
  %v2241 = vsub.f32 %v2201, %v2230
  %v2242 = vsub.f32 %v2203, %v2230
  %v2243 = vmul.f32 %v2231, %v2231
  %v2244 = vmul.f32 %v2232, %v2232
  %v2245 = vmul.f32 %v2233, %v2233
  %v2246 = vmul.f32 %v2234, %v2234
  %v2247 = vmul.f32 %v2235, %v2235
  %v2248 = vmul.f32 %v2236, %v2236
  %v2249 = vmul.f32 %v2237, %v2237
  %v2250 = vmul.f32 %v2238, %v2238
  %v2251 = vmul.f32 %v2239, %v2239
  %v2252 = vmul.f32 %v2240, %v2240
  %v2253 = vmul.f32 %v2241, %v2241
  %v2254 = vmul.f32 %v2242, %v2242
  %v2255 = vadd.f32 %v2243, %v2244
  %v2256 = vadd.f32 %v2255, %v2245
  %v2257 = vadd.f32 %v2256, %v2246
  %2258 = vadd.xlane.f32.xlu0 %v2257
  %v2259 = vpop.xlane.xlu0 %2258
  %v2260 = vadd.f32 %v2247, %v2248
  %v2261 = vadd.f32 %v2260, %v2249
  %v2262 = vadd.f32 %v2261, %v2250
  %2263 = vadd.xlane.f32.xlu0 %v2262
  %v2264 = vpop.xlane.xlu0 %2263
  %v2265 = vadd.f32 %v2251, %v2252
  %v2266 = vadd.f32 %v2265, %v2253
  %v2267 = vadd.f32 %v2266, %v2254
  %2268 = vadd.xlane.f32.xlu0 %v2267
  %v2269 = vpop.xlane.xlu0 %2268
  %v2270 = vmul.f32 %v2259, %v789
  %v2271 = vmul.f32 %v2264, %v789
  %v2272 = vmul.f32 %v2269, %v789
  %v2273 = vadd.f32 %v2270, 1e-05
  %v2274 = vadd.f32 %v2271, 1e-05
  %v2275 = vadd.f32 %v2272, 1e-05
  %v2276 = vrsqrt.pop %v2273
  %v2277 = vrsqrt.pop %v2274
  %v2278 = vrsqrt.pop %v2275
  %v2279 = vmul.f32 %v2207, %v2276
  %v2280 = vmul.f32 %v2208, %v2277
  %v2281 = vmul.f32 %v2209, %v2278
  %2283 = vset.pattern.permute.xlu0 0
  %2284 = vperm.xlu0 %2283, %v2279
  %v2285 = vpop.permute.xlu0 %2284
  %2288 = vset.pattern.permute.xlu0 0
  %2289 = vperm.xlu0 %2288, %v2280
  %v2290 = vpop.permute.xlu0 %2289
  %2293 = vset.pattern.permute.xlu0 0
  %2294 = vperm.xlu0 %2293, %v2281
  %v2295 = vpop.permute.xlu0 %2294
  %v2297 = vmul.f32 %v2140, %v2285
  %v2298 = vmul.f32 %v2142, %v2285
  %v2299 = vmul.f32 %v2191, %v2285
  %v2300 = vmul.f32 %v2193, %v2285
  %v2301 = vmul.f32 %v2144, %v2290
  %v2302 = vmul.f32 %v2146, %v2290
  %v2303 = vmul.f32 %v2195, %v2290
  %v2304 = vmul.f32 %v2197, %v2290
  %v2305 = vmul.f32 %v2150, %v2295
  %v2306 = vmul.f32 %v2152, %v2295
  %v2307 = vmul.f32 %v2201, %v2295
  %v2308 = vmul.f32 %v2203, %v2295
  %v2309 = vmul.f32 %v2228, %v2279
  %v2310 = vmul.f32 %v2229, %v2280
  %v2311 = vmul.f32 %v2230, %v2281
  %v2312 = vsub.f32 %v2210, %v2309
  %v2313 = vsub.f32 %v2211, %v2310
  %v2314 = vsub.f32 %v2212, %v2311
  %2316 = vset.pattern.permute.xlu0 0
  %2317 = vperm.xlu0 %2316, %v2312
  %v2318 = vpop.permute.xlu0 %2317
  %2321 = vset.pattern.permute.xlu0 0
  %2322 = vperm.xlu0 %2321, %v2313
  %v2323 = vpop.permute.xlu0 %2322
  %2326 = vset.pattern.permute.xlu0 0
  %2327 = vperm.xlu0 %2326, %v2314
  %v2328 = vpop.permute.xlu0 %2327
  %v2330 = vadd.f32 %v2297, %v2318
  %v2331 = vadd.f32 %v2298, %v2318
  %v2332 = vadd.f32 %v2299, %v2318
  %v2333 = vadd.f32 %v2300, %v2318
  %v2334 = vadd.f32 %v2301, %v2323
  %v2335 = vadd.f32 %v2302, %v2323
  %v2336 = vadd.f32 %v2303, %v2323
  %v2337 = vadd.f32 %v2304, %v2323
  %v2338 = vadd.f32 %v2305, %v2328
  %v2339 = vadd.f32 %v2306, %v2328
  %v2340 = vadd.f32 %v2307, %v2328
  %v2341 = vadd.f32 %v2308, %v2328
  %v2342 = vmax.f32 %v2330, 0.0
  %v2343 = vmax.f32 %v2331, 0.0
  %v2344 = vmax.f32 %v2332, 0.0
  %v2345 = vmax.f32 %v2333, 0.0
  %v2346 = vmax.f32 %v2334, 0.0
  %v2347 = vmax.f32 %v2335, 0.0
  %v2348 = vmax.f32 %v2336, 0.0
  %v2349 = vmax.f32 %v2337, 0.0
  %v2350 = vmax.f32 %v2338, 0.0
  %v2351 = vmax.f32 %v2339, 0.0
  %v2352 = vmax.f32 %v2340, 0.0
  %v2353 = vmax.f32 %v2341, 0.0
  %v2354 = vld [vmem:[%s14] sm:$0x7]
  %v2355 = vpack.c.bf16 %v2346, %v2342
  %v2356 = vpack.c.bf16 %v2347, %v2343
  %v2357 = vpack.c.bf16 %v2348, %v2344
  %v2358 = vpack.c.bf16 %v2349, %v2345
  %v2359 = vpack.c.bf16 %v2350, %v2350
  %v2360 = vpack.c.bf16 %v2351, %v2351
  %v2361 = vpack.c.bf16 %v2352, %v2352
  %v2362 = vpack.c.bf16 %v2353, %v2353
  %v2363 = vld [vmem:[%s15] sm:$0x3f]
  %2365 = vset.pattern.permute.xlu0 0
  %2366 = vperm.xlu0 %2365, %v2363
  %v2367 = vpop.permute.xlu0 %2366
  %v2370 = vsel %vm2086, %v2354, 0
  %v2373 = vsel %vm779, %v2359, 0
  %v2376 = vsel %vm779, %v2360, 0
  %v2379 = vsel %vm779, %v2361, 0
  %v2382 = vsel %vm779, %v2362, 0
  %2384 = vmatprep.subr.bf16.mxu0 %v2356
  %2385 = vmatpush1.bf16.msra.mxu0 %v2355
  %2386 = vmatprep.subr.bf16.mxu0 %v2376
  %2387 = vmatpush1.bf16.msra.mxu0 %v2373
  %2388 = vmatprep.subr.bf16.mxu0 0
  %2389 = vmatpush1.bf16.msra.mxu0 0
  %2390 = vmatprep.subr.bf16.mxu0 0
  %2391 = vmatpush1.bf16.msra.mxu0 0
  %2392 = vmatprep.subr.bf16.mxu0 0
  %2393 = vmatpush1.bf16.msra.mxu0 0
  %2394 = vmatprep.subr.bf16.mxu0 0
  %2395 = vmatpush1.bf16.msra.mxu0 0
  %2396 = vmatprep.subr.bf16.mxu0 0
  %2397 = vmatpush1.bf16.msra.mxu0 0
  %2398 = vmatprep.subr.bf16.mxu0 0
  %2399 = vmatpush1.bf16.msra.mxu0 0
  %2400 = vmatprep.subr.bf16.mxu0 0
  %2401 = vmatpush1.bf16.msra.mxu0 0
  %2402 = vmatprep.subr.bf16.mxu0 0
  %2403 = vmatpush1.bf16.msra.mxu0 0
  %2404 = vmatprep.subr.bf16.mxu0 0
  %2405 = vmatpush1.bf16.msra.mxu0 0
  %2406 = vmatprep.subr.bf16.mxu0 0
  %2407 = vmatpush1.bf16.msra.mxu0 0
  %2408 = vmatprep.subr.bf16.mxu0 0
  %2409 = vmatpush1.bf16.msra.mxu0 0
  %2410 = vmatprep.subr.bf16.mxu0 0
  %2411 = vmatpush1.bf16.msra.mxu0 0
  %2412 = vmatprep.subr.bf16.mxu0 0
  %2413 = vmatpush1.bf16.msra.mxu0 0
  %2414 = vmatprep.subr.bf16.mxu0 0
  %2415 = vmatpush1.bf16.msra.mxu0 0
  %2416 = vmatprep.mubr.bf16.mxu0 0
  %2417 = vmatmul.mubr.bf16.gmra.mrb[0].mxu0 %v2370
  %v2418 = vpop.f32.mrb[0].mxu0
  %v2419 = vadd.f32 %v2367, %v2418
  %v2420 = vpop.f32.mrb[0].mxu0
  %v2421 = vadd.f32 %v2367, %v2420
  %v2422 = vpop.f32.mrb[0].mxu0
  %v2423 = vpop.f32.mrb[0].mxu0
  %2424 = vdwg.mxu0
  %2425 = vmatprep.subr.bf16.mxu0 %v2358
  %2426 = vmatpush1.bf16.msra.mxu0 %v2357
  %2427 = vmatprep.subr.bf16.mxu0 %v2382
  %2428 = vmatpush1.bf16.msra.mxu0 %v2379
  %2429 = vmatprep.subr.bf16.mxu0 0
  %2430 = vmatpush1.bf16.msra.mxu0 0
  %2431 = vmatprep.subr.bf16.mxu0 0
  %2432 = vmatpush1.bf16.msra.mxu0 0
  %2433 = vmatprep.subr.bf16.mxu0 0
  %2434 = vmatpush1.bf16.msra.mxu0 0
  %2435 = vmatprep.subr.bf16.mxu0 0
  %2436 = vmatpush1.bf16.msra.mxu0 0
  %2437 = vmatprep.subr.bf16.mxu0 0
  %2438 = vmatpush1.bf16.msra.mxu0 0
  %2439 = vmatprep.subr.bf16.mxu0 0
  %2440 = vmatpush1.bf16.msra.mxu0 0
  %2441 = vmatprep.subr.bf16.mxu0 0
  %2442 = vmatpush1.bf16.msra.mxu0 0
  %2443 = vmatprep.subr.bf16.mxu0 0
  %2444 = vmatpush1.bf16.msra.mxu0 0
  %2445 = vmatprep.subr.bf16.mxu0 0
  %2446 = vmatpush1.bf16.msra.mxu0 0
  %2447 = vmatprep.subr.bf16.mxu0 0
  %2448 = vmatpush1.bf16.msra.mxu0 0
  %2449 = vmatprep.subr.bf16.mxu0 0
  %2450 = vmatpush1.bf16.msra.mxu0 0
  %2451 = vmatprep.subr.bf16.mxu0 0
  %2452 = vmatpush1.bf16.msra.mxu0 0
  %2453 = vmatprep.subr.bf16.mxu0 0
  %2454 = vmatpush1.bf16.msra.mxu0 0
  %2455 = vmatprep.subr.bf16.mxu0 0
  %2456 = vmatpush1.bf16.msra.mxu0 0
  %2457 = vmatprep.mubr.bf16.mxu0 0
  %2458 = vmatmul.mubr.bf16.gmra.mrb[0].mxu0 %v2370
  %v2459 = vpop.f32.mrb[0].mxu0
  %v2460 = vadd.f32 %v2367, %v2459
  %v2461 = vpop.f32.mrb[0].mxu0
  %v2462 = vadd.f32 %v2367, %v2461
  %v2463 = vpop.f32.mrb[0].mxu0
  %v2464 = vpop.f32.mrb[0].mxu0
  %2465 = vdwg.mxu0
  %v2466 = vsub.f32 0.0, %v2419
  %v2467 = vsub.f32 0.0, %v2421
  %v2468 = vsub.f32 0.0, %v2460
  %v2469 = vsub.f32 0.0, %v2462
  %v2470 = vmul.f32 %v2466, 1.442695
  %v2471 = vpow.pop %v2470
  %v2472 = vmul.f32 %v2467, 1.442695
  %v2473 = vpow.pop %v2472
  %v2474 = vmul.f32 %v2468, 1.442695
  %v2475 = vpow.pop %v2474
  %v2476 = vmul.f32 %v2469, 1.442695
  %v2477 = vpow.pop %v2476
  %v2478 = vadd.f32 %v2471, 1.0
  %v2479 = vadd.f32 %v2473, 1.0
  %v2480 = vadd.f32 %v2475, 1.0
  %v2481 = vadd.f32 %v2477, 1.0
  %v2482 = vrcp.pop %v2478
  %v2483 = vmul.f32 1.0, %v2482
  %v2484 = vrcp.pop %v2479
  %v2485 = vmul.f32 1.0, %v2484
  %v2486 = vrcp.pop %v2480
  %v2487 = vmul.f32 1.0, %v2486
  %v2488 = vrcp.pop %v2481
  %v2489 = vmul.f32 1.0, %v2488
  %v2490 = vld [vmem:[%s16] sm:$0x3f]
  %vm2491 = vcmp.gt.f32.partialorder %v2490, 0.5
  %v2492 = vsel %vm2491, 1, 0
  %2493 = vset.pattern.permute.xlu0 0
  %2494 = vperm.xlu0 %2493, %v2492
  %v2495 = vpop.permute.xlu0 %2494
  %vm2496 = vcmp.eq.s32.totalorder %v2495, 1
  %v2497 = vsel %vm2496, %v2483, %v2419
  %v2498 = vsel %vm2496, %v2485, %v2421
  %v2499 = vsel %vm2496, %v2487, %v2460
  %v2500 = vsel %vm2496, %v2489, %v2462
  %2501 = vst [vmem:[%s17] sm:$0x3f] %v2497
  %2502 = vst [vmem:[%s17 + $0x8] sm:$0x3f] %v2498
  %2503 = vst [vmem:[%s17 + $0x10] sm:$0x3f] %v2499
  %2504 = vst [vmem:[%s17 + $0x18] sm:$0x3f] %v2500
  // Predicated region
  $region70: #{head_forward.1} parent=0 // pred_check
    _
  $region71: #{head_forward.1} parent=0 // pred_check_branch
    %2506 = sbr.rel (0) target = $region73
  $region72: #{head_forward.1} parent=0 // pred_region
    _
  $region73: #{head_forward.1} parent=0 // pred_fallthru
    _
  // Predicated region
  $region74: #{head_forward.1} parent=0 // pred_check
    _
  $region75: #{head_forward.1} parent=0 // pred_check_branch
    %2508 = sbr.rel (0) target = $region77
  $region76: #{head_forward.1} parent=0 // pred_region
    _
  $region77: #{head_forward.1} parent=0 // pred_fallthru
    _

</llo_original>
